<compile_context>
chip_gen: v5e
topology: v5e:2x2
jax: 0.10.0
libtpu: 0.0.40
codegen_flags: <defaults>
</compile_context>

<pallas_src>
import jax
import jax.numpy as jnp
from jax import lax
from jax.experimental import pallas as pl
from jax.experimental.pallas import tpu as pltpu

LANE = 128


def _round_up(n, m):
    return ((n + m - 1) // m) * m


def _pad_gate_cols(w, H, HP):
    """(R, 4H) -> (R, 4HP): zero-pad each gate block [i, f, g, o] to width HP."""
    R = w.shape[0]
    w4 = w.reshape(R, 4, H)
    w4 = jnp.pad(w4, ((0, 0), (0, 0), (0, HP - H)))
    return w4.reshape(R, 4 * HP)


def _make_kernel(S, HP, O):
    def kernel(x_ref, h0_ref, c0_ref, wih_ref, whh_ref, b_ref, wl_ref, bl_ref,
               out_ref, hn_ref, cn_ref):
        # Input projection for every time step at once (off the serial path).
        xp = (jnp.dot(x_ref[...], wih_ref[...],
                      preferred_element_type=jnp.float32) + b_ref[...])   # (S, 4HP)

        whh = whh_ref[...]          # hoisted; stays resident across the unrolled loop
        h = h0_ref[...]             # (1, HP)
        c = c0_ref[...]             # (1, HP)

        hs_rows = []
        # Fully unrolled recurrence: static slices, full scheduler visibility.
        for t in range(S):
            gates = xp[t:t + 1, :] + jnp.dot(
                h, whh, preferred_element_type=jnp.float32)               # (1, 4HP)
            # Lane-aligned gate slices (each block is a multiple of 128 wide).
            i_g = jax.nn.sigmoid(gates[:, 0:HP])
            f_g = jax.nn.sigmoid(gates[:, HP:2 * HP])
            g_g = jnp.tanh(gates[:, 2 * HP:3 * HP])
            o_g = jax.nn.sigmoid(gates[:, 3 * HP:4 * HP])
            c = f_g * c + i_g * g_g
            h = o_g * jnp.tanh(c)
            hs_rows.append(h)

        hn_ref[...] = h
        cn_ref[...] = c

        hs = jnp.concatenate(hs_rows, axis=0)                             # (S, HP)

        # Output head: Linear -> ReLU -> log_softmax over the class axis.
        logits = (jnp.dot(hs, wl_ref[...], preferred_element_type=jnp.float32)
                  + bl_ref[...])                                          # (S, OP)
        relu = jnp.maximum(logits, 0.0)
        OP = out_ref.shape[1]
        valid = lax.broadcasted_iota(jnp.int32, (S, OP), 1) < O
        masked = jnp.where(valid, relu, -1e30)   # keep padded lanes out of max/sum
        m = jnp.max(masked, axis=-1, keepdims=True)
        z = masked - m
        lse = jnp.log(jnp.sum(jnp.exp(z), axis=-1, keepdims=True))
        out_ref[...] = z - lse                   # lane-dense (S, OP) store

    return kernel


def lstm_forward(x, h0, c0, w_ih, w_hh, b_ih, b_hh, w_lin, b_lin):
    S, _ = x.shape
    H = h0.shape[1]
    O = w_lin.shape[0]
    HP = _round_up(H, LANE)
    OP = _round_up(O, LANE)

    # Pre-transpose + lane-pad weights (zero padding keeps the math exact).
    wih_t = _pad_gate_cols(jnp.asarray(w_ih.T), H, HP)                  # (I, 4HP)
    whh_t = _pad_gate_cols(
        jnp.pad(jnp.asarray(w_hh.T), ((0, HP - H), (0, 0))), H, HP)     # (HP, 4HP)
    b = _pad_gate_cols((b_ih + b_hh).reshape(1, 4 * H), H, HP)          # (1, 4HP)
    wl_t = jnp.pad(jnp.asarray(w_lin.T), ((0, HP - H), (0, OP - O)))    # (HP, OP)
    bl = jnp.pad(b_lin.reshape(1, O), ((0, 0), (0, OP - O)))            # (1, OP)
    h0p = jnp.pad(h0, ((0, 0), (0, HP - H)))                            # (1, HP)
    c0p = jnp.pad(c0, ((0, 0), (0, HP - H)))                            # (1, HP)

    def vmem():
        return pl.BlockSpec(memory_space=pltpu.MemorySpace.VMEM)

    # TODO(synk): for large S, tile the input projection / output head over S
    # (grid axis or emit_pipeline) to respect v7x's smaller VMEM.
    out_p, hn_p, cn_p = pl.pallas_call(
        _make_kernel(S, HP, O),
        out_shape=(jax.ShapeDtypeStruct((S, OP), jnp.float32),
                   jax.ShapeDtypeStruct((1, HP), jnp.float32),
                   jax.ShapeDtypeStruct((1, HP), jnp.float32)),
        in_specs=[vmem() for _ in range(8)],
        out_specs=(vmem(), vmem(), vmem()),
        compiler_params=pltpu.CompilerParams(
            vmem_limit_bytes=32 * 1024 * 1024),
    )(x, h0p, c0p, wih_t, whh_t, b, wl_t, bl)

    return out_p[:, :O], hn_p[:, :H], cn_p[:, :H]


def lstm_ref(x, h0, c0, w_ih, w_hh, b_ih, b_hh, w_lin, b_lin):
    """Pure-JAX reference matching PyTorch nn.LSTM (unbatched) semantics."""
    H = h0.shape[1]

    def step(carry, xt):
        h, c = carry                               # (1, H) each
        gates = xt @ w_ih.T + b_ih + h[0] @ w_hh.T + b_hh
        i = jax.nn.sigmoid(gates[0:H])
        f = jax.nn.sigmoid(gates[H:2 * H])
        g = jnp.tanh(gates[2 * H:3 * H])
        o = jax.nn.sigmoid(gates[3 * H:4 * H])
        c_new = f * c[0] + i * g
        h_new = o * jnp.tanh(c_new)
        return (h_new[None], c_new[None]), h_new

    (hn, cn), hs = lax.scan(step, (h0, c0), x)
    logits = hs @ w_lin.T + b_lin
    relu = jnp.maximum(logits, 0.0)
    out = jax.nn.log_softmax(relu, axis=1)
    return out, hn, cn


if __name__ == "__main__":
    # Shapes consistent with the module's forward; hidden=128 matches init_hidden.
    SEQ, INPUT, HIDDEN, OUTPUT = 8, 16, 128, 16

    key = jax.random.PRNGKey(0)
    ks = jax.random.split(key, 9)
    k = 1.0 / jnp.sqrt(HIDDEN)

    x = jax.random.normal(ks[0], (SEQ, INPUT), dtype=jnp.float32)
    h0 = jnp.zeros((1, HIDDEN), dtype=jnp.float32)
    c0 = jnp.zeros((1, HIDDEN), dtype=jnp.float32)

    w_ih = jax.random.uniform(ks[1], (4 * HIDDEN, INPUT), minval=-k, maxval=k)
    w_hh = jax.random.uniform(ks[2], (4 * HIDDEN, HIDDEN), minval=-k, maxval=k)
    b_ih = jax.random.uniform(ks[3], (4 * HIDDEN,), minval=-k, maxval=k)
    b_hh = jax.random.uniform(ks[4], (4 * HIDDEN,), minval=-k, maxval=k)
    w_lin = jax.random.uniform(ks[5], (OUTPUT, HIDDEN), minval=-k, maxval=k)
    b_lin = jax.random.uniform(ks[6], (OUTPUT,), minval=-k, maxval=k)

    out, hn, cn = jax.block_until_ready(
        lstm_forward(x, h0, c0, w_ih, w_hh, b_ih, b_hh, w_lin, b_lin))

    out_r, hn_r, cn_r = lstm_ref(x, h0, c0, w_ih, w_hh, b_ih, b_hh,
                                 w_lin, b_lin)

    assert out.shape == (SEQ, OUTPUT) and hn.shape == (1, HIDDEN)
    assert jnp.allclose(out, out_r, rtol=1e-4, atol=1e-4)
    assert jnp.allclose(hn, hn_r, rtol=1e-4, atol=1e-4)
    assert jnp.allclose(cn, cn_r, rtol=1e-4, atol=1e-4)

    print("KERNEL_OK")
</pallas_src>

<mosaic_0001>
module attributes {stable_mosaic.version = 11 : i64} {
  func.func @kernel(%arg0: memref<8x16xf32, #tpu.memory_space<vmem>>, %arg1: memref<1x128xf32, #tpu.memory_space<vmem>>, %arg2: memref<1x128xf32, #tpu.memory_space<vmem>>, %arg3: memref<16x512xf32, #tpu.memory_space<vmem>>, %arg4: memref<128x512xf32, #tpu.memory_space<vmem>>, %arg5: memref<1x512xf32, #tpu.memory_space<vmem>>, %arg6: memref<128x128xf32, #tpu.memory_space<vmem>>, %arg7: memref<1x128xf32, #tpu.memory_space<vmem>>, %arg8: memref<8x128xf32, #tpu.memory_space<vmem>>, %arg9: memref<1x128xf32, #tpu.memory_space<vmem>>, %arg10: memref<1x128xf32, #tpu.memory_space<vmem>>) attributes {dimension_semantics = [], scalar_prefetch = 0 : i64, scratch_operands = 0 : i64, tpu.core_type = #tpu.core_type<tc>} {
    %c0 = arith.constant 0 : index
    %c0_0 = arith.constant 0 : index
    %0 = vector.load %arg0[%c0, %c0_0] : memref<8x16xf32, #tpu.memory_space<vmem>>, vector<8x16xf32>
    %c0_1 = arith.constant 0 : index
    %c0_2 = arith.constant 0 : index
    %1 = vector.load %arg3[%c0_1, %c0_2] : memref<16x512xf32, #tpu.memory_space<vmem>>, vector<16x512xf32>
    %cst = arith.constant dense<0.000000e+00> : vector<8x512xf32>
    %2 = tpu.matmul %0, %1, %cst {dimension_numbers = #tpu.dot_dimension_numbers<[1], [0], [0], [1], [0, 0, 1, 1], [], []>} : vector<8x16xf32>, vector<16x512xf32>, vector<8x512xf32> -> vector<8x512xf32>
    %c0_3 = arith.constant 0 : index
    %c0_4 = arith.constant 0 : index
    %3 = vector.load %arg5[%c0_3, %c0_4] : memref<1x512xf32, #tpu.memory_space<vmem>>, vector<1x512xf32>
    %4 = vector.broadcast %3 : vector<1x512xf32> to vector<8x512xf32>
    %5 = arith.addf %2, %4 : vector<8x512xf32>
    %c0_5 = arith.constant 0 : index
    %c0_6 = arith.constant 0 : index
    %6 = vector.load %arg4[%c0_5, %c0_6] : memref<128x512xf32, #tpu.memory_space<vmem>>, vector<128x512xf32>
    %c0_7 = arith.constant 0 : index
    %c0_8 = arith.constant 0 : index
    %7 = vector.load %arg1[%c0_7, %c0_8] : memref<1x128xf32, #tpu.memory_space<vmem>>, vector<1x128xf32>
    %c0_9 = arith.constant 0 : index
    %c0_10 = arith.constant 0 : index
    %8 = vector.load %arg2[%c0_9, %c0_10] : memref<1x128xf32, #tpu.memory_space<vmem>>, vector<1x128xf32>
    %9 = vector.extract_strided_slice %5 {offsets = [0, 0], sizes = [1, 512], strides = [1, 1]} : vector<8x512xf32> to vector<1x512xf32>
    %cst_11 = arith.constant dense<0.000000e+00> : vector<1x512xf32>
    %10 = tpu.matmul %7, %6, %cst_11 {dimension_numbers = #tpu.dot_dimension_numbers<[1], [0], [0], [1], [0, 0, 1, 1], [], []>} : vector<1x128xf32>, vector<128x512xf32>, vector<1x512xf32> -> vector<1x512xf32>
    %11 = arith.addf %9, %10 : vector<1x512xf32>
    %12 = vector.extract_strided_slice %11 {offsets = [0, 0], sizes = [1, 128], strides = [1, 1]} : vector<1x512xf32> to vector<1x128xf32>
    %13 = arith.negf %12 : vector<1x128xf32>
    %14 = math.exp %13 : vector<1x128xf32>
    %cst_12 = arith.constant 1.000000e+00 : f32
    %15 = vector.broadcast %cst_12 : f32 to vector<1x128xf32>
    %16 = arith.addf %15, %14 : vector<1x128xf32>
    %17 = arith.divf %15, %16 : vector<1x128xf32>
    %18 = vector.extract_strided_slice %11 {offsets = [0, 128], sizes = [1, 128], strides = [1, 1]} : vector<1x512xf32> to vector<1x128xf32>
    %19 = arith.negf %18 : vector<1x128xf32>
    %20 = math.exp %19 : vector<1x128xf32>
    %cst_13 = arith.constant 1.000000e+00 : f32
    %21 = vector.broadcast %cst_13 : f32 to vector<1x128xf32>
    %22 = arith.addf %21, %20 : vector<1x128xf32>
    %23 = arith.divf %21, %22 : vector<1x128xf32>
    %24 = vector.extract_strided_slice %11 {offsets = [0, 256], sizes = [1, 128], strides = [1, 1]} : vector<1x512xf32> to vector<1x128xf32>
    %25 = math.tanh %24 : vector<1x128xf32>
    %26 = vector.extract_strided_slice %11 {offsets = [0, 384], sizes = [1, 128], strides = [1, 1]} : vector<1x512xf32> to vector<1x128xf32>
    %27 = arith.negf %26 : vector<1x128xf32>
    %28 = math.exp %27 : vector<1x128xf32>
    %cst_14 = arith.constant 1.000000e+00 : f32
    %29 = vector.broadcast %cst_14 : f32 to vector<1x128xf32>
    %30 = arith.addf %29, %28 : vector<1x128xf32>
    %31 = arith.divf %29, %30 : vector<1x128xf32>
    %32 = arith.mulf %23, %8 : vector<1x128xf32>
    %33 = arith.mulf %17, %25 : vector<1x128xf32>
    %34 = arith.addf %32, %33 : vector<1x128xf32>
    %35 = math.tanh %34 : vector<1x128xf32>
    %36 = arith.mulf %31, %35 : vector<1x128xf32>
    %37 = vector.extract_strided_slice %5 {offsets = [1, 0], sizes = [1, 512], strides = [1, 1]} : vector<8x512xf32> to vector<1x512xf32>
    %cst_15 = arith.constant dense<0.000000e+00> : vector<1x512xf32>
    %38 = tpu.matmul %36, %6, %cst_15 {dimension_numbers = #tpu.dot_dimension_numbers<[1], [0], [0], [1], [0, 0, 1, 1], [], []>} : vector<1x128xf32>, vector<128x512xf32>, vector<1x512xf32> -> vector<1x512xf32>
    %39 = arith.addf %37, %38 : vector<1x512xf32>
    %40 = vector.extract_strided_slice %39 {offsets = [0, 0], sizes = [1, 128], strides = [1, 1]} : vector<1x512xf32> to vector<1x128xf32>
    %41 = arith.negf %40 : vector<1x128xf32>
    %42 = math.exp %41 : vector<1x128xf32>
    %cst_16 = arith.constant 1.000000e+00 : f32
    %43 = vector.broadcast %cst_16 : f32 to vector<1x128xf32>
    %44 = arith.addf %43, %42 : vector<1x128xf32>
    %45 = arith.divf %43, %44 : vector<1x128xf32>
    %46 = vector.extract_strided_slice %39 {offsets = [0, 128], sizes = [1, 128], strides = [1, 1]} : vector<1x512xf32> to vector<1x128xf32>
    %47 = arith.negf %46 : vector<1x128xf32>
    %48 = math.exp %47 : vector<1x128xf32>
    %cst_17 = arith.constant 1.000000e+00 : f32
    %49 = vector.broadcast %cst_17 : f32 to vector<1x128xf32>
    %50 = arith.addf %49, %48 : vector<1x128xf32>
    %51 = arith.divf %49, %50 : vector<1x128xf32>
    %52 = vector.extract_strided_slice %39 {offsets = [0, 256], sizes = [1, 128], strides = [1, 1]} : vector<1x512xf32> to vector<1x128xf32>
    %53 = math.tanh %52 : vector<1x128xf32>
    %54 = vector.extract_strided_slice %39 {offsets = [0, 384], sizes = [1, 128], strides = [1, 1]} : vector<1x512xf32> to vector<1x128xf32>
    %55 = arith.negf %54 : vector<1x128xf32>
    %56 = math.exp %55 : vector<1x128xf32>
    %cst_18 = arith.constant 1.000000e+00 : f32
    %57 = vector.broadcast %cst_18 : f32 to vector<1x128xf32>
    %58 = arith.addf %57, %56 : vector<1x128xf32>
    %59 = arith.divf %57, %58 : vector<1x128xf32>
    %60 = arith.mulf %51, %34 : vector<1x128xf32>
    %61 = arith.mulf %45, %53 : vector<1x128xf32>
    %62 = arith.addf %60, %61 : vector<1x128xf32>
    %63 = math.tanh %62 : vector<1x128xf32>
    %64 = arith.mulf %59, %63 : vector<1x128xf32>
    %65 = vector.extract_strided_slice %5 {offsets = [2, 0], sizes = [1, 512], strides = [1, 1]} : vector<8x512xf32> to vector<1x512xf32>
    %cst_19 = arith.constant dense<0.000000e+00> : vector<1x512xf32>
    %66 = tpu.matmul %64, %6, %cst_19 {dimension_numbers = #tpu.dot_dimension_numbers<[1], [0], [0], [1], [0, 0, 1, 1], [], []>} : vector<1x128xf32>, vector<128x512xf32>, vector<1x512xf32> -> vector<1x512xf32>
    %67 = arith.addf %65, %66 : vector<1x512xf32>
    %68 = vector.extract_strided_slice %67 {offsets = [0, 0], sizes = [1, 128], strides = [1, 1]} : vector<1x512xf32> to vector<1x128xf32>
    %69 = arith.negf %68 : vector<1x128xf32>
    %70 = math.exp %69 : vector<1x128xf32>
    %cst_20 = arith.constant 1.000000e+00 : f32
    %71 = vector.broadcast %cst_20 : f32 to vector<1x128xf32>
    %72 = arith.addf %71, %70 : vector<1x128xf32>
    %73 = arith.divf %71, %72 : vector<1x128xf32>
    %74 = vector.extract_strided_slice %67 {offsets = [0, 128], sizes = [1, 128], strides = [1, 1]} : vector<1x512xf32> to vector<1x128xf32>
    %75 = arith.negf %74 : vector<1x128xf32>
    %76 = math.exp %75 : vector<1x128xf32>
    %cst_21 = arith.constant 1.000000e+00 : f32
    %77 = vector.broadcast %cst_21 : f32 to vector<1x128xf32>
    %78 = arith.addf %77, %76 : vector<1x128xf32>
    %79 = arith.divf %77, %78 : vector<1x128xf32>
    %80 = vector.extract_strided_slice %67 {offsets = [0, 256], sizes = [1, 128], strides = [1, 1]} : vector<1x512xf32> to vector<1x128xf32>
    %81 = math.tanh %80 : vector<1x128xf32>
    %82 = vector.extract_strided_slice %67 {offsets = [0, 384], sizes = [1, 128], strides = [1, 1]} : vector<1x512xf32> to vector<1x128xf32>
    %83 = arith.negf %82 : vector<1x128xf32>
    %84 = math.exp %83 : vector<1x128xf32>
    %cst_22 = arith.constant 1.000000e+00 : f32
    %85 = vector.broadcast %cst_22 : f32 to vector<1x128xf32>
    %86 = arith.addf %85, %84 : vector<1x128xf32>
    %87 = arith.divf %85, %86 : vector<1x128xf32>
    %88 = arith.mulf %79, %62 : vector<1x128xf32>
    %89 = arith.mulf %73, %81 : vector<1x128xf32>
    %90 = arith.addf %88, %89 : vector<1x128xf32>
    %91 = math.tanh %90 : vector<1x128xf32>
    %92 = arith.mulf %87, %91 : vector<1x128xf32>
    %93 = vector.extract_strided_slice %5 {offsets = [3, 0], sizes = [1, 512], strides = [1, 1]} : vector<8x512xf32> to vector<1x512xf32>
    %cst_23 = arith.constant dense<0.000000e+00> : vector<1x512xf32>
    %94 = tpu.matmul %92, %6, %cst_23 {dimension_numbers = #tpu.dot_dimension_numbers<[1], [0], [0], [1], [0, 0, 1, 1], [], []>} : vector<1x128xf32>, vector<128x512xf32>, vector<1x512xf32> -> vector<1x512xf32>
    %95 = arith.addf %93, %94 : vector<1x512xf32>
    %96 = vector.extract_strided_slice %95 {offsets = [0, 0], sizes = [1, 128], strides = [1, 1]} : vector<1x512xf32> to vector<1x128xf32>
    %97 = arith.negf %96 : vector<1x128xf32>
    %98 = math.exp %97 : vector<1x128xf32>
    %cst_24 = arith.constant 1.000000e+00 : f32
    %99 = vector.broadcast %cst_24 : f32 to vector<1x128xf32>
    %100 = arith.addf %99, %98 : vector<1x128xf32>
    %101 = arith.divf %99, %100 : vector<1x128xf32>
    %102 = vector.extract_strided_slice %95 {offsets = [0, 128], sizes = [1, 128], strides = [1, 1]} : vector<1x512xf32> to vector<1x128xf32>
    %103 = arith.negf %102 : vector<1x128xf32>
    %104 = math.exp %103 : vector<1x128xf32>
    %cst_25 = arith.constant 1.000000e+00 : f32
    %105 = vector.broadcast %cst_25 : f32 to vector<1x128xf32>
    %106 = arith.addf %105, %104 : vector<1x128xf32>
    %107 = arith.divf %105, %106 : vector<1x128xf32>
    %108 = vector.extract_strided_slice %95 {offsets = [0, 256], sizes = [1, 128], strides = [1, 1]} : vector<1x512xf32> to vector<1x128xf32>
    %109 = math.tanh %108 : vector<1x128xf32>
    %110 = vector.extract_strided_slice %95 {offsets = [0, 384], sizes = [1, 128], strides = [1, 1]} : vector<1x512xf32> to vector<1x128xf32>
    %111 = arith.negf %110 : vector<1x128xf32>
    %112 = math.exp %111 : vector<1x128xf32>
    %cst_26 = arith.constant 1.000000e+00 : f32
    %113 = vector.broadcast %cst_26 : f32 to vector<1x128xf32>
    %114 = arith.addf %113, %112 : vector<1x128xf32>
    %115 = arith.divf %113, %114 : vector<1x128xf32>
    %116 = arith.mulf %107, %90 : vector<1x128xf32>
    %117 = arith.mulf %101, %109 : vector<1x128xf32>
    %118 = arith.addf %116, %117 : vector<1x128xf32>
    %119 = math.tanh %118 : vector<1x128xf32>
    %120 = arith.mulf %115, %119 : vector<1x128xf32>
    %121 = vector.extract_strided_slice %5 {offsets = [4, 0], sizes = [1, 512], strides = [1, 1]} : vector<8x512xf32> to vector<1x512xf32>
    %cst_27 = arith.constant dense<0.000000e+00> : vector<1x512xf32>
    %122 = tpu.matmul %120, %6, %cst_27 {dimension_numbers = #tpu.dot_dimension_numbers<[1], [0], [0], [1], [0, 0, 1, 1], [], []>} : vector<1x128xf32>, vector<128x512xf32>, vector<1x512xf32> -> vector<1x512xf32>
    %123 = arith.addf %121, %122 : vector<1x512xf32>
    %124 = vector.extract_strided_slice %123 {offsets = [0, 0], sizes = [1, 128], strides = [1, 1]} : vector<1x512xf32> to vector<1x128xf32>
    %125 = arith.negf %124 : vector<1x128xf32>
    %126 = math.exp %125 : vector<1x128xf32>
    %cst_28 = arith.constant 1.000000e+00 : f32
    %127 = vector.broadcast %cst_28 : f32 to vector<1x128xf32>
    %128 = arith.addf %127, %126 : vector<1x128xf32>
    %129 = arith.divf %127, %128 : vector<1x128xf32>
    %130 = vector.extract_strided_slice %123 {offsets = [0, 128], sizes = [1, 128], strides = [1, 1]} : vector<1x512xf32> to vector<1x128xf32>
    %131 = arith.negf %130 : vector<1x128xf32>
    %132 = math.exp %131 : vector<1x128xf32>
    %cst_29 = arith.constant 1.000000e+00 : f32
    %133 = vector.broadcast %cst_29 : f32 to vector<1x128xf32>
    %134 = arith.addf %133, %132 : vector<1x128xf32>
    %135 = arith.divf %133, %134 : vector<1x128xf32>
    %136 = vector.extract_strided_slice %123 {offsets = [0, 256], sizes = [1, 128], strides = [1, 1]} : vector<1x512xf32> to vector<1x128xf32>
    %137 = math.tanh %136 : vector<1x128xf32>
    %138 = vector.extract_strided_slice %123 {offsets = [0, 384], sizes = [1, 128], strides = [1, 1]} : vector<1x512xf32> to vector<1x128xf32>
    %139 = arith.negf %138 : vector<1x128xf32>
    %140 = math.exp %139 : vector<1x128xf32>
    %cst_30 = arith.constant 1.000000e+00 : f32
    %141 = vector.broadcast %cst_30 : f32 to vector<1x128xf32>
    %142 = arith.addf %141, %140 : vector<1x128xf32>
    %143 = arith.divf %141, %142 : vector<1x128xf32>
    %144 = arith.mulf %135, %118 : vector<1x128xf32>
    %145 = arith.mulf %129, %137 : vector<1x128xf32>
    %146 = arith.addf %144, %145 : vector<1x128xf32>
    %147 = math.tanh %146 : vector<1x128xf32>
    %148 = arith.mulf %143, %147 : vector<1x128xf32>
    %149 = vector.extract_strided_slice %5 {offsets = [5, 0], sizes = [1, 512], strides = [1, 1]} : vector<8x512xf32> to vector<1x512xf32>
    %cst_31 = arith.constant dense<0.000000e+00> : vector<1x512xf32>
    %150 = tpu.matmul %148, %6, %cst_31 {dimension_numbers = #tpu.dot_dimension_numbers<[1], [0], [0], [1], [0, 0, 1, 1], [], []>} : vector<1x128xf32>, vector<128x512xf32>, vector<1x512xf32> -> vector<1x512xf32>
    %151 = arith.addf %149, %150 : vector<1x512xf32>
    %152 = vector.extract_strided_slice %151 {offsets = [0, 0], sizes = [1, 128], strides = [1, 1]} : vector<1x512xf32> to vector<1x128xf32>
    %153 = arith.negf %152 : vector<1x128xf32>
    %154 = math.exp %153 : vector<1x128xf32>
    %cst_32 = arith.constant 1.000000e+00 : f32
    %155 = vector.broadcast %cst_32 : f32 to vector<1x128xf32>
    %156 = arith.addf %155, %154 : vector<1x128xf32>
    %157 = arith.divf %155, %156 : vector<1x128xf32>
    %158 = vector.extract_strided_slice %151 {offsets = [0, 128], sizes = [1, 128], strides = [1, 1]} : vector<1x512xf32> to vector<1x128xf32>
    %159 = arith.negf %158 : vector<1x128xf32>
    %160 = math.exp %159 : vector<1x128xf32>
    %cst_33 = arith.constant 1.000000e+00 : f32
    %161 = vector.broadcast %cst_33 : f32 to vector<1x128xf32>
    %162 = arith.addf %161, %160 : vector<1x128xf32>
    %163 = arith.divf %161, %162 : vector<1x128xf32>
    %164 = vector.extract_strided_slice %151 {offsets = [0, 256], sizes = [1, 128], strides = [1, 1]} : vector<1x512xf32> to vector<1x128xf32>
    %165 = math.tanh %164 : vector<1x128xf32>
    %166 = vector.extract_strided_slice %151 {offsets = [0, 384], sizes = [1, 128], strides = [1, 1]} : vector<1x512xf32> to vector<1x128xf32>
    %167 = arith.negf %166 : vector<1x128xf32>
    %168 = math.exp %167 : vector<1x128xf32>
    %cst_34 = arith.constant 1.000000e+00 : f32
    %169 = vector.broadcast %cst_34 : f32 to vector<1x128xf32>
    %170 = arith.addf %169, %168 : vector<1x128xf32>
    %171 = arith.divf %169, %170 : vector<1x128xf32>
    %172 = arith.mulf %163, %146 : vector<1x128xf32>
    %173 = arith.mulf %157, %165 : vector<1x128xf32>
    %174 = arith.addf %172, %173 : vector<1x128xf32>
    %175 = math.tanh %174 : vector<1x128xf32>
    %176 = arith.mulf %171, %175 : vector<1x128xf32>
    %177 = vector.extract_strided_slice %5 {offsets = [6, 0], sizes = [1, 512], strides = [1, 1]} : vector<8x512xf32> to vector<1x512xf32>
    %cst_35 = arith.constant dense<0.000000e+00> : vector<1x512xf32>
    %178 = tpu.matmul %176, %6, %cst_35 {dimension_numbers = #tpu.dot_dimension_numbers<[1], [0], [0], [1], [0, 0, 1, 1], [], []>} : vector<1x128xf32>, vector<128x512xf32>, vector<1x512xf32> -> vector<1x512xf32>
    %179 = arith.addf %177, %178 : vector<1x512xf32>
    %180 = vector.extract_strided_slice %179 {offsets = [0, 0], sizes = [1, 128], strides = [1, 1]} : vector<1x512xf32> to vector<1x128xf32>
    %181 = arith.negf %180 : vector<1x128xf32>
    %182 = math.exp %181 : vector<1x128xf32>
    %cst_36 = arith.constant 1.000000e+00 : f32
    %183 = vector.broadcast %cst_36 : f32 to vector<1x128xf32>
    %184 = arith.addf %183, %182 : vector<1x128xf32>
    %185 = arith.divf %183, %184 : vector<1x128xf32>
    %186 = vector.extract_strided_slice %179 {offsets = [0, 128], sizes = [1, 128], strides = [1, 1]} : vector<1x512xf32> to vector<1x128xf32>
    %187 = arith.negf %186 : vector<1x128xf32>
    %188 = math.exp %187 : vector<1x128xf32>
    %cst_37 = arith.constant 1.000000e+00 : f32
    %189 = vector.broadcast %cst_37 : f32 to vector<1x128xf32>
    %190 = arith.addf %189, %188 : vector<1x128xf32>
    %191 = arith.divf %189, %190 : vector<1x128xf32>
    %192 = vector.extract_strided_slice %179 {offsets = [0, 256], sizes = [1, 128], strides = [1, 1]} : vector<1x512xf32> to vector<1x128xf32>
    %193 = math.tanh %192 : vector<1x128xf32>
    %194 = vector.extract_strided_slice %179 {offsets = [0, 384], sizes = [1, 128], strides = [1, 1]} : vector<1x512xf32> to vector<1x128xf32>
    %195 = arith.negf %194 : vector<1x128xf32>
    %196 = math.exp %195 : vector<1x128xf32>
    %cst_38 = arith.constant 1.000000e+00 : f32
    %197 = vector.broadcast %cst_38 : f32 to vector<1x128xf32>
    %198 = arith.addf %197, %196 : vector<1x128xf32>
    %199 = arith.divf %197, %198 : vector<1x128xf32>
    %200 = arith.mulf %191, %174 : vector<1x128xf32>
    %201 = arith.mulf %185, %193 : vector<1x128xf32>
    %202 = arith.addf %200, %201 : vector<1x128xf32>
    %203 = math.tanh %202 : vector<1x128xf32>
    %204 = arith.mulf %199, %203 : vector<1x128xf32>
    %205 = vector.extract_strided_slice %5 {offsets = [7, 0], sizes = [1, 512], strides = [1, 1]} : vector<8x512xf32> to vector<1x512xf32>
    %cst_39 = arith.constant dense<0.000000e+00> : vector<1x512xf32>
    %206 = tpu.matmul %204, %6, %cst_39 {dimension_numbers = #tpu.dot_dimension_numbers<[1], [0], [0], [1], [0, 0, 1, 1], [], []>} : vector<1x128xf32>, vector<128x512xf32>, vector<1x512xf32> -> vector<1x512xf32>
    %207 = arith.addf %205, %206 : vector<1x512xf32>
    %208 = vector.extract_strided_slice %207 {offsets = [0, 0], sizes = [1, 128], strides = [1, 1]} : vector<1x512xf32> to vector<1x128xf32>
    %209 = arith.negf %208 : vector<1x128xf32>
    %210 = math.exp %209 : vector<1x128xf32>
    %cst_40 = arith.constant 1.000000e+00 : f32
    %211 = vector.broadcast %cst_40 : f32 to vector<1x128xf32>
    %212 = arith.addf %211, %210 : vector<1x128xf32>
    %213 = arith.divf %211, %212 : vector<1x128xf32>
    %214 = vector.extract_strided_slice %207 {offsets = [0, 128], sizes = [1, 128], strides = [1, 1]} : vector<1x512xf32> to vector<1x128xf32>
    %215 = arith.negf %214 : vector<1x128xf32>
    %216 = math.exp %215 : vector<1x128xf32>
    %cst_41 = arith.constant 1.000000e+00 : f32
    %217 = vector.broadcast %cst_41 : f32 to vector<1x128xf32>
    %218 = arith.addf %217, %216 : vector<1x128xf32>
    %219 = arith.divf %217, %218 : vector<1x128xf32>
    %220 = vector.extract_strided_slice %207 {offsets = [0, 256], sizes = [1, 128], strides = [1, 1]} : vector<1x512xf32> to vector<1x128xf32>
    %221 = math.tanh %220 : vector<1x128xf32>
    %222 = vector.extract_strided_slice %207 {offsets = [0, 384], sizes = [1, 128], strides = [1, 1]} : vector<1x512xf32> to vector<1x128xf32>
    %223 = arith.negf %222 : vector<1x128xf32>
    %224 = math.exp %223 : vector<1x128xf32>
    %cst_42 = arith.constant 1.000000e+00 : f32
    %225 = vector.broadcast %cst_42 : f32 to vector<1x128xf32>
    %226 = arith.addf %225, %224 : vector<1x128xf32>
    %227 = arith.divf %225, %226 : vector<1x128xf32>
    %228 = arith.mulf %219, %202 : vector<1x128xf32>
    %229 = arith.mulf %213, %221 : vector<1x128xf32>
    %230 = arith.addf %228, %229 : vector<1x128xf32>
    %231 = math.tanh %230 : vector<1x128xf32>
    %232 = arith.mulf %227, %231 : vector<1x128xf32>
    %c0_43 = arith.constant 0 : index
    %c0_44 = arith.constant 0 : index
    %233 = vector.load %arg9[%c0_43, %c0_44] : memref<1x128xf32, #tpu.memory_space<vmem>>, vector<1x128xf32>
    tpu.vector_store %arg9[%c0_43, %c0_44], %232 {strides = array<i32>} : memref<1x128xf32, #tpu.memory_space<vmem>>, vector<1x128xf32>,
    %c0_45 = arith.constant 0 : index
    %c0_46 = arith.constant 0 : index
    %234 = vector.load %arg10[%c0_45, %c0_46] : memref<1x128xf32, #tpu.memory_space<vmem>>, vector<1x128xf32>
    tpu.vector_store %arg10[%c0_45, %c0_46], %230 {strides = array<i32>} : memref<1x128xf32, #tpu.memory_space<vmem>>, vector<1x128xf32>,
    %235 = tpu.concatenate %36, %64, %92, %120, %148, %176, %204, %232 in 0 : vector<1x128xf32>, vector<1x128xf32>, vector<1x128xf32>, vector<1x128xf32>, vector<1x128xf32>, vector<1x128xf32>, vector<1x128xf32>, vector<1x128xf32> -> vector<8x128xf32>
    %c0_47 = arith.constant 0 : index
    %c0_48 = arith.constant 0 : index
    %236 = vector.load %arg6[%c0_47, %c0_48] : memref<128x128xf32, #tpu.memory_space<vmem>>, vector<128x128xf32>
    %cst_49 = arith.constant dense<0.000000e+00> : vector<8x128xf32>
    %237 = tpu.matmul %235, %236, %cst_49 {dimension_numbers = #tpu.dot_dimension_numbers<[1], [0], [0], [1], [0, 0, 1, 1], [], []>} : vector<8x128xf32>, vector<128x128xf32>, vector<8x128xf32> -> vector<8x128xf32>
    %c0_50 = arith.constant 0 : index
    %c0_51 = arith.constant 0 : index
    %238 = vector.load %arg7[%c0_50, %c0_51] : memref<1x128xf32, #tpu.memory_space<vmem>>, vector<1x128xf32>
    %239 = vector.broadcast %238 : vector<1x128xf32> to vector<8x128xf32>
    %240 = arith.addf %237, %239 : vector<8x128xf32>
    %cst_52 = arith.constant 0.000000e+00 : f32
    %241 = vector.broadcast %cst_52 : f32 to vector<8x128xf32>
    %242 = arith.maximumf %240, %241 : vector<8x128xf32>
    %243 = tpu.iota {dimensions = array<i32: 1>} : vector<8x128xi32>
    %c16_i32 = arith.constant 16 : i32
    %244 = vector.broadcast %c16_i32 : i32 to vector<8x128xi32>
    %245 = arith.cmpi slt, %243, %244 : vector<8x128xi32>
    %cst_53 = arith.constant -1.000000e+30 : f32
    %246 = vector.broadcast %cst_53 : f32 to vector<8x128xf32>
    %247 = arith.select %245, %242, %246 : vector<8x128xi1>, vector<8x128xf32>
    %cst_54 = arith.constant dense<0xFF800000> : vector<8xf32>
    %248 = vector.multi_reduction <maximumf>, %247, %cst_54 [1] : vector<8x128xf32> to vector<8xf32>
    %249 = vector.shape_cast %248 : vector<8xf32> to vector<8x1xf32>
    %250 = vector.broadcast %249 : vector<8x1xf32> to vector<8x128xf32>
    %251 = arith.subf %247, %250 : vector<8x128xf32>
    %252 = math.exp %251 : vector<8x128xf32>
    %cst_55 = arith.constant dense<0.000000e+00> : vector<8xf32>
    %253 = vector.multi_reduction <add>, %252, %cst_55 [1] : vector<8x128xf32> to vector<8xf32>
    %254 = vector.shape_cast %253 : vector<8xf32> to vector<8x1xf32>
    %255 = math.log %254 : vector<8x1xf32>
    %256 = vector.broadcast %255 : vector<8x1xf32> to vector<8x128xf32>
    %257 = arith.subf %251, %256 : vector<8x128xf32>
    %c0_56 = arith.constant 0 : index
    %c0_57 = arith.constant 0 : index
    %258 = vector.load %arg8[%c0_56, %c0_57] : memref<8x128xf32, #tpu.memory_space<vmem>>, vector<8x128xf32>
    tpu.vector_store %arg8[%c0_56, %c0_57], %257 {strides = array<i32>} : memref<8x128xf32, #tpu.memory_space<vmem>>, vector<8x128xf32>,
    return
  }
}

</mosaic_0001>

<llo_original>
// kernel: tpu_custom_call.1
$region0: #{tpu_custom_call.1}
  #allocation0 [shape = 'u32[]', space=smem, size = 0x4, offset = 0x4, fixed_abs, tag = 'smem constant byte address 0x4 - core index']
  #allocation1 [shape = 'u32[72,128]{1,0:T(1,128)}', space=vmem, size = 0x9000, scoped, tag = 'internal scratch']
  %s0 = inlined_call_operand.hbm [shape: f32[8,16], index: 0, kind: input, shape index: {}]
  %s1 = inlined_call_operand.hbm [shape: f32[1,128], index: 1, kind: input, shape index: {}]
  %s2 = inlined_call_operand.hbm [shape: f32[1,128], index: 2, kind: input, shape index: {}]
  %s3 = inlined_call_operand.hbm [shape: f32[16,512], index: 3, kind: input, shape index: {}]
  %s4 = inlined_call_operand.hbm [shape: f32[128,512], index: 4, kind: input, shape index: {}]
  %s5 = inlined_call_operand.vmem [shape: f32[1,512], index: 5, kind: input, shape index: {}]
  %s6 = inlined_call_operand.hbm [shape: f32[128,128], index: 6, kind: input, shape index: {}]
  %s7 = inlined_call_operand.vmem [shape: f32[1,128], index: 7, kind: input, shape index: {}]
  %s8 = inlined_call_operand.hbm [shape: f32[8,128], index: 8, kind: output, shape index: {0}]
  %s9 = inlined_call_operand.hbm [shape: f32[1,128], index: 9, kind: output, shape index: {1}]
  %s10 = inlined_call_operand.hbm [shape: f32[1,128], index: 10, kind: output, shape index: {2}]
  %11 = xla_tuple %s8, %s9, %s10
  %s12 = sld [smem:[#allocation0]]
  $region82: #{tpu_custom_call.1} parent=0
    _
  %s14 = ssub.s32 1, %s12
  %s15 = scalar_select 0, %s14, %s12
  $region1: #{tpu_custom_call.1} parent=0
    #allocation2 [shape = 'u8[4096]{0}', space=vmem, size = 0x1000, scoped, tag = 'input window, operand 0, single buffered']
    #allocation3 [shape = 's32[1]{0}', space=sflag, size = 0x4, scoped, tag = 'scoped memory for tpu_custom_call.1']
    #allocation4 [shape = 's32[1]{0}', space=sflag, size = 0x4, scoped, tag = 'scoped memory for tpu_custom_call.1']
    #allocation5 [shape = 'u8[512]{0}', space=vmem, size = 0x400, scoped, tag = 'input window, operand 1, single buffered']
    #allocation6 [shape = 's32[1]{0}', space=sflag, size = 0x4, scoped, tag = 'scoped memory for tpu_custom_call.1']
    #allocation7 [shape = 'u8[512]{0}', space=vmem, size = 0x400, scoped, tag = 'input window, operand 2, single buffered']
    #allocation8 [shape = 'u8[32768]{0}', space=vmem, size = 0x8000, scoped, tag = 'input window, operand 3, single buffered']
    #allocation9 [shape = 's32[1]{0}', space=sflag, size = 0x4, scoped, tag = 'scoped memory for tpu_custom_call.1']
    #allocation10 [shape = 'u8[262144]{0}', space=vmem, size = 0x40000, scoped, tag = 'input window, operand 4, single buffered']
    #allocation11 [shape = 'u8[65536]{0}', space=vmem, size = 0x10000, scoped, tag = 'input window, operand 6, single buffered']
    #allocation12 [shape = 's32[1]{0}', space=sflag, size = 0x4, scoped, tag = 'scoped memory for tpu_custom_call.1']
    #allocation13 [shape = 'u8[4096]{0}', space=vmem, size = 0x1000, scoped, tag = 'output window, operand 0, single buffered']
    #allocation14 [shape = 'u8[512]{0}', space=vmem, size = 0x400, scoped, tag = 'output window, operand 1, single buffered']
    #allocation15 [shape = 's32[1]{0}', space=sflag, size = 0x4, scoped, tag = 'scoped memory for tpu_custom_call.1']
    #allocation16 [shape = 'u8[512]{0}', space=vmem, size = 0x400, scoped, tag = 'output window, operand 2, single buffered']
    %16 = vsyncpa [#allocation3], 0
    %17 = vsyncpa [#allocation6], 0
    %18 = vsyncpa [#allocation9], 0
    %19 = vsyncpa [#allocation12], 0
    %20 = vsyncpa [#allocation4], 0
    %21 = vsyncpa [#allocation15], 0
    // Predicated region
    $region2: #{tpu_custom_call.1} parent=1 // pred_check
      _
    $region3: #{tpu_custom_call.1} parent=1 // pred_check_branch
      %23 = sbr.rel (0) target = $region5
    $region4: #{tpu_custom_call.1} parent=1 // pred_region
      %25 = vsyncadd [#allocation3], 0
      %s27 = sshll.u32 %s0, 4
      %s28 = int_to_ptr.hbm [resolvable:$true] %s27
      %s29 = sshll.u32 [#allocation2], 4
      %s30 = int_to_ptr.vmem [resolvable:$true] %s29
      %32 = dma.hbm_to_vmem [thread:$0]  %s28, 128, %s30, [#allocation3]
    $region5: #{tpu_custom_call.1} parent=1 // pred_fallthru
      _
    // Predicated region
    $region6: #{tpu_custom_call.1} parent=1 // pred_check
      _
    $region7: #{tpu_custom_call.1} parent=1 // pred_check_branch
      %34 = sbr.rel (0) target = $region9
    $region8: #{tpu_custom_call.1} parent=1 // pred_region
      %36 = vsyncadd [#allocation6], 0
      %s38 = sshll.u32 %s1, 4
      %s39 = int_to_ptr.hbm [resolvable:$true] %s38
      %s40 = sshll.u32 [#allocation5], 4
      %s41 = int_to_ptr.vmem [resolvable:$true] %s40
      %43 = dma.hbm_to_vmem [thread:$0]  %s39, 16, %s41, [#allocation6]
    $region9: #{tpu_custom_call.1} parent=1 // pred_fallthru
      _
    // Predicated region
    $region10: #{tpu_custom_call.1} parent=1 // pred_check
      _
    $region11: #{tpu_custom_call.1} parent=1 // pred_check_branch
      %45 = sbr.rel (0) target = $region13
    $region12: #{tpu_custom_call.1} parent=1 // pred_region
      %47 = vsyncadd [#allocation6], 0
      %s49 = sshll.u32 %s2, 4
      %s50 = int_to_ptr.hbm [resolvable:$true] %s49
      %s51 = sshll.u32 [#allocation7], 4
      %s52 = int_to_ptr.vmem [resolvable:$true] %s51
      %54 = dma.hbm_to_vmem [thread:$0]  %s50, 16, %s52, [#allocation6]
    $region13: #{tpu_custom_call.1} parent=1 // pred_fallthru
      _
    // Predicated region
    $region14: #{tpu_custom_call.1} parent=1 // pred_check
      _
    $region15: #{tpu_custom_call.1} parent=1 // pred_check_branch
      %56 = sbr.rel (0) target = $region17
    $region16: #{tpu_custom_call.1} parent=1 // pred_region
      %58 = vsyncadd [#allocation9], 0
      %s59 = sshll.u32 %s3, 4
      %s60 = int_to_ptr.hbm [resolvable:$true] %s59
      %s61 = sshll.u32 [#allocation8], 4
      %s62 = int_to_ptr.vmem [resolvable:$true] %s61
      %67 = dma.hbm_to_vmem [thread:$0]  %s60, 1024, %s62, [#allocation9], 512, 512, 32
    $region17: #{tpu_custom_call.1} parent=1 // pred_fallthru
      _
    // Predicated region
    $region18: #{tpu_custom_call.1} parent=1 // pred_check
      _
    $region19: #{tpu_custom_call.1} parent=1 // pred_check_branch
      %69 = sbr.rel (0) target = $region21
    $region20: #{tpu_custom_call.1} parent=1 // pred_region
      %71 = vsyncadd [#allocation9], 0
      %s72 = sshll.u32 %s4, 4
      %s73 = int_to_ptr.hbm [resolvable:$true] %s72
      %s74 = sshll.u32 [#allocation10], 4
      %s75 = int_to_ptr.vmem [resolvable:$true] %s74
      %80 = dma.hbm_to_vmem [thread:$0]  %s73, 8192, %s75, [#allocation9], 512, 512, 32
    $region21: #{tpu_custom_call.1} parent=1 // pred_fallthru
      _
    // Predicated region
    $region22: #{tpu_custom_call.1} parent=1 // pred_check
      _
    $region23: #{tpu_custom_call.1} parent=1 // pred_check_branch
      %82 = sbr.rel (0) target = $region25
    $region24: #{tpu_custom_call.1} parent=1 // pred_region
      _
    $region25: #{tpu_custom_call.1} parent=1 // pred_fallthru
      _
    // Predicated region
    $region26: #{tpu_custom_call.1} parent=1 // pred_check
      _
    $region27: #{tpu_custom_call.1} parent=1 // pred_check_branch
      %84 = sbr.rel (0) target = $region29
    $region28: #{tpu_custom_call.1} parent=1 // pred_region
      %86 = vsyncadd [#allocation12], 0
      %s87 = sshll.u32 %s6, 4
      %s88 = int_to_ptr.hbm [resolvable:$true] %s87
      %s89 = sshll.u32 [#allocation11], 4
      %s90 = int_to_ptr.vmem [resolvable:$true] %s89
      %95 = dma.hbm_to_vmem [thread:$0]  %s88, 2048, %s90, [#allocation12], 128, 128, 8
    $region29: #{tpu_custom_call.1} parent=1 // pred_fallthru
      _
    // Predicated region
    $region30: #{tpu_custom_call.1} parent=1 // pred_check
      _
    $region31: #{tpu_custom_call.1} parent=1 // pred_check_branch
      %97 = sbr.rel (0) target = $region33
    $region32: #{tpu_custom_call.1} parent=1 // pred_region
      _
    $region33: #{tpu_custom_call.1} parent=1 // pred_fallthru
      _
    // Predicated region
    $region34: #{tpu_custom_call.1} parent=1 // pred_check
      _
    $region35: #{tpu_custom_call.1} parent=1 // pred_check_branch
      %99 = sbr.rel (0) target = $region37
    $region36: #{tpu_custom_call.1} parent=1 // pred_region
      %101 = dma.done [#allocation3], 128
    $region37: #{tpu_custom_call.1} parent=1 // pred_fallthru
      _
    // Predicated region
    $region38: #{tpu_custom_call.1} parent=1 // pred_check
      _
    $region39: #{tpu_custom_call.1} parent=1 // pred_check_branch
      %103 = sbr.rel (0) target = $region41
    $region40: #{tpu_custom_call.1} parent=1 // pred_region
      %105 = dma.done [#allocation6], 16
    $region41: #{tpu_custom_call.1} parent=1 // pred_fallthru
      _
    // Predicated region
    $region42: #{tpu_custom_call.1} parent=1 // pred_check
      _
    $region43: #{tpu_custom_call.1} parent=1 // pred_check_branch
      %107 = sbr.rel (0) target = $region45
    $region44: #{tpu_custom_call.1} parent=1 // pred_region
      %109 = dma.done [#allocation6], 16
    $region45: #{tpu_custom_call.1} parent=1 // pred_fallthru
      _
    // Predicated region
    $region46: #{tpu_custom_call.1} parent=1 // pred_check
      _
    $region47: #{tpu_custom_call.1} parent=1 // pred_check_branch
      %111 = sbr.rel (0) target = $region49
    $region48: #{tpu_custom_call.1} parent=1 // pred_region
      %113 = dma.done [#allocation9], 1024
    $region49: #{tpu_custom_call.1} parent=1 // pred_fallthru
      _
    // Predicated region
    $region50: #{tpu_custom_call.1} parent=1 // pred_check
      _
    $region51: #{tpu_custom_call.1} parent=1 // pred_check_branch
      %115 = sbr.rel (0) target = $region53
    $region52: #{tpu_custom_call.1} parent=1 // pred_region
      %117 = dma.done [#allocation9], 8192
    $region53: #{tpu_custom_call.1} parent=1 // pred_fallthru
      _
    // Predicated region
    $region54: #{tpu_custom_call.1} parent=1 // pred_check
      _
    $region55: #{tpu_custom_call.1} parent=1 // pred_check_branch
      %119 = sbr.rel (0) target = $region57
    $region56: #{tpu_custom_call.1} parent=1 // pred_region
      %121 = dma.done [#allocation12], 2048
    $region57: #{tpu_custom_call.1} parent=1 // pred_fallthru
      _
    %v122 = vld [vmem:[#allocation2] sm:$0xff]
    %v123 = vld [vmem:[#allocation8] sm:$0xff]
    %v124 = vld [vmem:[#allocation8 + $0x8] sm:$0xff]
    %v125 = vld [vmem:[#allocation8 + $0x10] sm:$0xff]
    %v126 = vld [vmem:[#allocation8 + $0x18] sm:$0xff]
    %v127 = vld [vmem:[#allocation8 + $0x20] sm:$0xff]
    %v128 = vld [vmem:[#allocation8 + $0x28] sm:$0xff]
    %v129 = vld [vmem:[#allocation8 + $0x30] sm:$0xff]
    %v130 = vld [vmem:[#allocation8 + $0x38] sm:$0xff]
    %v131 = vld [vmem:[%s5] sm:$0xf]
    %v133 = vperm.slane %v131, 0
    %v134 = vperm.slane %v131, 1
    %v135 = vperm.slane %v131, 2
    %v136 = vperm.slane %v131, 3
    %vm141 = vcmask 130048
    %v143 = vsel %vm141, %v122, 0
    %145 = vmatpush.msra.mxu0 0.0
    %146 = vmatpush.msra.mxu0 0.0
    %147 = vmatpush.msra.mxu0 0.0
    %148 = vmatpush.msra.mxu0 0.0
    %149 = vmatpush.msra.mxu0 0.0
    %150 = vmatpush.msra.mxu0 0.0
    %151 = vmatpush.msra.mxu0 0.0
    %152 = vmatpush.msra.mxu0 0.0
    %153 = vmatpush.msra.mxu0 0.0
    %154 = vmatpush.msra.mxu0 0.0
    %155 = vmatpush.msra.mxu0 0.0
    %156 = vmatpush.msra.mxu0 0.0
    %157 = vmatpush.msra.mxu0 0.0
    %158 = vmatpush.msra.mxu0 0.0
    %159 = vmatpush.msra.mxu0 %v127
    %160 = vmatpush.msra.mxu0 %v123
    %161 = vmatmul.f32.gmra.mxu0 %v143
    %v162 = vpop.f32.mrf.mxu0
    %v163 = vadd.f32 %v133, %v162
    %164 = vdwg.mxu0
    %165 = vmatpush.msra.mxu0 0.0
    %166 = vmatpush.msra.mxu0 0.0
    %167 = vmatpush.msra.mxu0 0.0
    %168 = vmatpush.msra.mxu0 0.0
    %169 = vmatpush.msra.mxu0 0.0
    %170 = vmatpush.msra.mxu0 0.0
    %171 = vmatpush.msra.mxu0 0.0
    %172 = vmatpush.msra.mxu0 0.0
    %173 = vmatpush.msra.mxu0 0.0
    %174 = vmatpush.msra.mxu0 0.0
    %175 = vmatpush.msra.mxu0 0.0
    %176 = vmatpush.msra.mxu0 0.0
    %177 = vmatpush.msra.mxu0 0.0
    %178 = vmatpush.msra.mxu0 0.0
    %179 = vmatpush.msra.mxu0 %v128
    %180 = vmatpush.msra.mxu0 %v124
    %181 = vmatmul.f32.gmra.mxu0 %v143
    %v182 = vpop.f32.mrf.mxu0
    %v183 = vadd.f32 %v134, %v182
    %184 = vdwg.mxu0
    %185 = vmatpush.msra.mxu0 0.0
    %186 = vmatpush.msra.mxu0 0.0
    %187 = vmatpush.msra.mxu0 0.0
    %188 = vmatpush.msra.mxu0 0.0
    %189 = vmatpush.msra.mxu0 0.0
    %190 = vmatpush.msra.mxu0 0.0
    %191 = vmatpush.msra.mxu0 0.0
    %192 = vmatpush.msra.mxu0 0.0
    %193 = vmatpush.msra.mxu0 0.0
    %194 = vmatpush.msra.mxu0 0.0
    %195 = vmatpush.msra.mxu0 0.0
    %196 = vmatpush.msra.mxu0 0.0
    %197 = vmatpush.msra.mxu0 0.0
    %198 = vmatpush.msra.mxu0 0.0
    %199 = vmatpush.msra.mxu0 %v129
    %200 = vmatpush.msra.mxu0 %v125
    %201 = vmatmul.f32.gmra.mxu0 %v143
    %v202 = vpop.f32.mrf.mxu0
    %v203 = vadd.f32 %v135, %v202
    %204 = vdwg.mxu0
    %205 = vmatpush.msra.mxu0 0.0
    %206 = vmatpush.msra.mxu0 0.0
    %207 = vmatpush.msra.mxu0 0.0
    %208 = vmatpush.msra.mxu0 0.0
    %209 = vmatpush.msra.mxu0 0.0
    %210 = vmatpush.msra.mxu0 0.0
    %211 = vmatpush.msra.mxu0 0.0
    %212 = vmatpush.msra.mxu0 0.0
    %213 = vmatpush.msra.mxu0 0.0
    %214 = vmatpush.msra.mxu0 0.0
    %215 = vmatpush.msra.mxu0 0.0
    %216 = vmatpush.msra.mxu0 0.0
    %217 = vmatpush.msra.mxu0 0.0
    %218 = vmatpush.msra.mxu0 0.0
    %219 = vmatpush.msra.mxu0 %v130
    %220 = vmatpush.msra.mxu0 %v126
    %221 = vmatmul.f32.gmra.mxu0 %v143
    %v222 = vpop.f32.mrf.mxu0
    %v223 = vadd.f32 %v136, %v222
    %224 = vdwg.mxu0
    %v225 = vld [vmem:[#allocation10] sm:$0xff]
    %v226 = vld [vmem:[#allocation10 + $0x8] sm:$0xff]
    %v227 = vld [vmem:[#allocation10 + $0x10] sm:$0xff]
    %v228 = vld [vmem:[#allocation10 + $0x18] sm:$0xff]
    %v229 = vld [vmem:[#allocation10 + $0x20] sm:$0xff]
    %v230 = vld [vmem:[#allocation10 + $0x28] sm:$0xff]
    %v231 = vld [vmem:[#allocation10 + $0x30] sm:$0xff]
    %v232 = vld [vmem:[#allocation10 + $0x38] sm:$0xff]
    %v233 = vld [vmem:[#allocation10 + $0x40] sm:$0xff]
    %v234 = vld [vmem:[#allocation10 + $0x48] sm:$0xff]
    %v235 = vld [vmem:[#allocation10 + $0x50] sm:$0xff]
    %v236 = vld [vmem:[#allocation10 + $0x58] sm:$0xff]
    %v237 = vld [vmem:[#allocation10 + $0x60] sm:$0xff]
    %v238 = vld [vmem:[#allocation10 + $0x68] sm:$0xff]
    %v239 = vld [vmem:[#allocation10 + $0x70] sm:$0xff]
    %v240 = vld [vmem:[#allocation10 + $0x78] sm:$0xff]
    %v241 = vld [vmem:[#allocation10 + $0x80] sm:$0xff]
    %v242 = vld [vmem:[#allocation10 + $0x88] sm:$0xff]
    %v243 = vld [vmem:[#allocation10 + $0x90] sm:$0xff]
    %v244 = vld [vmem:[#allocation10 + $0x98] sm:$0xff]
    %v245 = vld [vmem:[#allocation10 + $0xa0] sm:$0xff]
    %v246 = vld [vmem:[#allocation10 + $0xa8] sm:$0xff]
    %v247 = vld [vmem:[#allocation10 + $0xb0] sm:$0xff]
    %v248 = vld [vmem:[#allocation10 + $0xb8] sm:$0xff]
    %v249 = vld [vmem:[#allocation10 + $0xc0] sm:$0xff]
    %v250 = vld [vmem:[#allocation10 + $0xc8] sm:$0xff]
    %v251 = vld [vmem:[#allocation10 + $0xd0] sm:$0xff]
    %v252 = vld [vmem:[#allocation10 + $0xd8] sm:$0xff]
    %v253 = vld [vmem:[#allocation10 + $0xe0] sm:$0xff]
    %v254 = vld [vmem:[#allocation10 + $0xe8] sm:$0xff]
    %v255 = vld [vmem:[#allocation10 + $0xf0] sm:$0xff]
    %v256 = vld [vmem:[#allocation10 + $0xf8] sm:$0xff]
    %v257 = vld [vmem:[#allocation10 + $0x100] sm:$0xff]
    %v258 = vld [vmem:[#allocation10 + $0x108] sm:$0xff]
    %v259 = vld [vmem:[#allocation10 + $0x110] sm:$0xff]
    %v260 = vld [vmem:[#allocation10 + $0x118] sm:$0xff]
    %v261 = vld [vmem:[#allocation10 + $0x120] sm:$0xff]
    %v262 = vld [vmem:[#allocation10 + $0x128] sm:$0xff]
    %v263 = vld [vmem:[#allocation10 + $0x130] sm:$0xff]
    %v264 = vld [vmem:[#allocation10 + $0x138] sm:$0xff]
    %v265 = vld [vmem:[#allocation10 + $0x140] sm:$0xff]
    %v266 = vld [vmem:[#allocation10 + $0x148] sm:$0xff]
    %v267 = vld [vmem:[#allocation10 + $0x150] sm:$0xff]
    %v268 = vld [vmem:[#allocation10 + $0x158] sm:$0xff]
    %v269 = vld [vmem:[#allocation10 + $0x160] sm:$0xff]
    %v270 = vld [vmem:[#allocation10 + $0x168] sm:$0xff]
    %v271 = vld [vmem:[#allocation10 + $0x170] sm:$0xff]
    %v272 = vld [vmem:[#allocation10 + $0x178] sm:$0xff]
    %v273 = vld [vmem:[#allocation10 + $0x180] sm:$0xff]
    %v274 = vld [vmem:[#allocation10 + $0x188] sm:$0xff]
    %v275 = vld [vmem:[#allocation10 + $0x190] sm:$0xff]
    %v276 = vld [vmem:[#allocation10 + $0x198] sm:$0xff]
    %v277 = vld [vmem:[#allocation10 + $0x1a0] sm:$0xff]
    %v278 = vld [vmem:[#allocation10 + $0x1a8] sm:$0xff]
    %v279 = vld [vmem:[#allocation10 + $0x1b0] sm:$0xff]
    %v280 = vld [vmem:[#allocation10 + $0x1b8] sm:$0xff]
    %v281 = vld [vmem:[#allocation10 + $0x1c0] sm:$0xff]
    %v282 = vld [vmem:[#allocation10 + $0x1c8] sm:$0xff]
    %v283 = vld [vmem:[#allocation10 + $0x1d0] sm:$0xff]
    %v284 = vld [vmem:[#allocation10 + $0x1d8] sm:$0xff]
    %v285 = vld [vmem:[#allocation10 + $0x1e0] sm:$0xff]
    %v286 = vld [vmem:[#allocation10 + $0x1e8] sm:$0xff]
    %v287 = vld [vmem:[#allocation10 + $0x1f0] sm:$0xff]
    %v288 = vld [vmem:[#allocation10 + $0x1f8] sm:$0xff]
    %v289 = vld [vmem:[#allocation5] sm:$0x1]
    %v290 = vld [vmem:[#allocation7] sm:$0x1]
    %291 = vmatpush.msra.mxu0 %v285
    %292 = vmatpush.msra.mxu0 %v281
    %293 = vmatpush.msra.mxu0 %v277
    %294 = vmatpush.msra.mxu0 %v273
    %295 = vmatpush.msra.mxu0 %v269
    %296 = vmatpush.msra.mxu0 %v265
    %297 = vmatpush.msra.mxu0 %v261
    %298 = vmatpush.msra.mxu0 %v257
    %299 = vmatpush.msra.mxu0 %v253
    %300 = vmatpush.msra.mxu0 %v249
    %301 = vmatpush.msra.mxu0 %v245
    %302 = vmatpush.msra.mxu0 %v241
    %303 = vmatpush.msra.mxu0 %v237
    %304 = vmatpush.msra.mxu0 %v233
    %305 = vmatpush.msra.mxu0 %v229
    %306 = vmatpush.msra.mxu0 %v225
    %307 = vmatmul.f32.gmra.mxu0 %v289
    %v308 = vpop.f32.mrf.mxu0
    %v309 = vadd.f32 0.0, %v308
    %310 = vdwg.mxu0
    %311 = vmatpush.msra.mxu0 %v286
    %312 = vmatpush.msra.mxu0 %v282
    %313 = vmatpush.msra.mxu0 %v278
    %314 = vmatpush.msra.mxu0 %v274
    %315 = vmatpush.msra.mxu0 %v270
    %316 = vmatpush.msra.mxu0 %v266
    %317 = vmatpush.msra.mxu0 %v262
    %318 = vmatpush.msra.mxu0 %v258
    %319 = vmatpush.msra.mxu0 %v254
    %320 = vmatpush.msra.mxu0 %v250
    %321 = vmatpush.msra.mxu0 %v246
    %322 = vmatpush.msra.mxu0 %v242
    %323 = vmatpush.msra.mxu0 %v238
    %324 = vmatpush.msra.mxu0 %v234
    %325 = vmatpush.msra.mxu0 %v230
    %326 = vmatpush.msra.mxu0 %v226
    %327 = vmatmul.f32.gmra.mxu0 %v289
    %v328 = vpop.f32.mrf.mxu0
    %v329 = vadd.f32 0.0, %v328
    %330 = vdwg.mxu0
    %331 = vmatpush.msra.mxu0 %v287
    %332 = vmatpush.msra.mxu0 %v283
    %333 = vmatpush.msra.mxu0 %v279
    %334 = vmatpush.msra.mxu0 %v275
    %335 = vmatpush.msra.mxu0 %v271
    %336 = vmatpush.msra.mxu0 %v267
    %337 = vmatpush.msra.mxu0 %v263
    %338 = vmatpush.msra.mxu0 %v259
    %339 = vmatpush.msra.mxu0 %v255
    %340 = vmatpush.msra.mxu0 %v251
    %341 = vmatpush.msra.mxu0 %v247
    %342 = vmatpush.msra.mxu0 %v243
    %343 = vmatpush.msra.mxu0 %v239
    %344 = vmatpush.msra.mxu0 %v235
    %345 = vmatpush.msra.mxu0 %v231
    %346 = vmatpush.msra.mxu0 %v227
    %347 = vmatmul.f32.gmra.mxu0 %v289
    %v348 = vpop.f32.mrf.mxu0
    %v349 = vadd.f32 0.0, %v348
    %350 = vdwg.mxu0
    %351 = vmatpush.msra.mxu0 %v288
    %352 = vmatpush.msra.mxu0 %v284
    %353 = vmatpush.msra.mxu0 %v280
    %354 = vmatpush.msra.mxu0 %v276
    %355 = vmatpush.msra.mxu0 %v272
    %356 = vmatpush.msra.mxu0 %v268
    %357 = vmatpush.msra.mxu0 %v264
    %358 = vmatpush.msra.mxu0 %v260
    %359 = vmatpush.msra.mxu0 %v256
    %360 = vmatpush.msra.mxu0 %v252
    %361 = vmatpush.msra.mxu0 %v248
    %362 = vmatpush.msra.mxu0 %v244
    %363 = vmatpush.msra.mxu0 %v240
    %364 = vmatpush.msra.mxu0 %v236
    %365 = vmatpush.msra.mxu0 %v232
    %366 = vmatpush.msra.mxu0 %v228
    %367 = vmatmul.f32.gmra.mxu0 %v289
    %v368 = vpop.f32.mrf.mxu0
    %v369 = vadd.f32 0.0, %v368
    %370 = vdwg.mxu0
    %v371 = vadd.f32 %v163, %v309
    %v372 = vadd.f32 %v183, %v329
    %v373 = vadd.f32 %v203, %v349
    %v374 = vadd.f32 %v223, %v369
    %v375 = vxor.u32 %v371, 2147483648
    %v376 = vmul.f32 %v375, 1.442695
    %v377 = vpow.pop %v376
    %v378 = vadd.f32 %v377, 1.0
    %v379 = vrcp.pop %v378
    %v380 = vmul.f32 %v378, %v379
    %v381 = vsub.f32 1.0, %v380
    %v382 = vmul.f32 %v379, %v381
    %v383 = vadd.f32 %v379, %v382
    %vm384 = vweird.f32 %v378
    %vm385 = vweird.f32 %v379
    %vm386 = vmor %vm384, %vm385
    %v387 = vsel %vm386, %v379, %v383
    %v388 = vand.u32 2147483647, %v378
    %vm389 = vcmp.eq.f32.partialorder %v388, 8.507059e+37
    %v390 = vand.u32 %v378, 2147483648
    %v391 = vor.u32 1.1754944e-38, %v390
    %v392 = vsel %vm389, %v391, %v387
    %v393 = vmul.f32 1.0, %v392
    %v394 = vxor.u32 %v372, 2147483648
    %v395 = vmul.f32 %v394, 1.442695
    %v396 = vpow.pop %v395
    %v397 = vadd.f32 %v396, 1.0
    %v398 = vrcp.pop %v397
    %v399 = vmul.f32 %v397, %v398
    %v400 = vsub.f32 1.0, %v399
    %v401 = vmul.f32 %v398, %v400
    %v402 = vadd.f32 %v398, %v401
    %vm403 = vweird.f32 %v397
    %vm404 = vweird.f32 %v398
    %vm405 = vmor %vm403, %vm404
    %v406 = vsel %vm405, %v398, %v402
    %v407 = vand.u32 2147483647, %v397
    %vm408 = vcmp.eq.f32.partialorder %v407, 8.507059e+37
    %v409 = vand.u32 %v397, 2147483648
    %v410 = vor.u32 1.1754944e-38, %v409
    %v411 = vsel %vm408, %v410, %v406
    %v412 = vmul.f32 1.0, %v411
    %v413 = vtanh.pop %v373
    %v414 = vxor.u32 %v374, 2147483648
    %v415 = vmul.f32 %v414, 1.442695
    %v416 = vpow.pop %v415
    %v417 = vadd.f32 %v416, 1.0
    %v418 = vrcp.pop %v417
    %v419 = vmul.f32 %v417, %v418
    %v420 = vsub.f32 1.0, %v419
    %v421 = vmul.f32 %v418, %v420
    %v422 = vadd.f32 %v418, %v421
    %vm423 = vweird.f32 %v417
    %vm424 = vweird.f32 %v418
    %vm425 = vmor %vm423, %vm424
    %v426 = vsel %vm425, %v418, %v422
    %v427 = vand.u32 2147483647, %v417
    %vm428 = vcmp.eq.f32.partialorder %v427, 8.507059e+37
    %v429 = vand.u32 %v417, 2147483648
    %v430 = vor.u32 1.1754944e-38, %v429
    %v431 = vsel %vm428, %v430, %v426
    %v432 = vmul.f32 1.0, %v431
    %v433 = vmul.f32 %v412, %v290
    %v434 = vmul.f32 %v393, %v413
    %v435 = vadd.f32 %v433, %v434
    %v436 = vtanh.pop %v435
    %v437 = vmul.f32 %v432, %v436
    %438 = vmatpush.msra.mxu0 %v285
    %439 = vmatpush.msra.mxu0 %v281
    %440 = vmatpush.msra.mxu0 %v277
    %441 = vmatpush.msra.mxu0 %v273
    %442 = vmatpush.msra.mxu0 %v269
    %443 = vmatpush.msra.mxu0 %v265
    %444 = vmatpush.msra.mxu0 %v261
    %445 = vmatpush.msra.mxu0 %v257
    %446 = vmatpush.msra.mxu0 %v253
    %447 = vmatpush.msra.mxu0 %v249
    %448 = vmatpush.msra.mxu0 %v245
    %449 = vmatpush.msra.mxu0 %v241
    %450 = vmatpush.msra.mxu0 %v237
    %451 = vmatpush.msra.mxu0 %v233
    %452 = vmatpush.msra.mxu0 %v229
    %453 = vmatpush.msra.mxu0 %v225
    %454 = vmatmul.f32.gmra.mxu0 %v437
    %v455 = vpop.f32.mrf.mxu0
    %v456 = vadd.f32 0.0, %v455
    %457 = vdwg.mxu0
    %458 = vmatpush.msra.mxu0 %v286
    %459 = vmatpush.msra.mxu0 %v282
    %460 = vmatpush.msra.mxu0 %v278
    %461 = vmatpush.msra.mxu0 %v274
    %462 = vmatpush.msra.mxu0 %v270
    %463 = vmatpush.msra.mxu0 %v266
    %464 = vmatpush.msra.mxu0 %v262
    %465 = vmatpush.msra.mxu0 %v258
    %466 = vmatpush.msra.mxu0 %v254
    %467 = vmatpush.msra.mxu0 %v250
    %468 = vmatpush.msra.mxu0 %v246
    %469 = vmatpush.msra.mxu0 %v242
    %470 = vmatpush.msra.mxu0 %v238
    %471 = vmatpush.msra.mxu0 %v234
    %472 = vmatpush.msra.mxu0 %v230
    %473 = vmatpush.msra.mxu0 %v226
    %474 = vmatmul.f32.gmra.mxu0 %v437
    %v475 = vpop.f32.mrf.mxu0
    %v476 = vadd.f32 0.0, %v475
    %477 = vdwg.mxu0
    %478 = vmatpush.msra.mxu0 %v287
    %479 = vmatpush.msra.mxu0 %v283
    %480 = vmatpush.msra.mxu0 %v279
    %481 = vmatpush.msra.mxu0 %v275
    %482 = vmatpush.msra.mxu0 %v271
    %483 = vmatpush.msra.mxu0 %v267
    %484 = vmatpush.msra.mxu0 %v263
    %485 = vmatpush.msra.mxu0 %v259
    %486 = vmatpush.msra.mxu0 %v255
    %487 = vmatpush.msra.mxu0 %v251
    %488 = vmatpush.msra.mxu0 %v247
    %489 = vmatpush.msra.mxu0 %v243
    %490 = vmatpush.msra.mxu0 %v239
    %491 = vmatpush.msra.mxu0 %v235
    %492 = vmatpush.msra.mxu0 %v231
    %493 = vmatpush.msra.mxu0 %v227
    %494 = vmatmul.f32.gmra.mxu0 %v437
    %v495 = vpop.f32.mrf.mxu0
    %v496 = vadd.f32 0.0, %v495
    %497 = vdwg.mxu0
    %498 = vmatpush.msra.mxu0 %v288
    %499 = vmatpush.msra.mxu0 %v284
    %500 = vmatpush.msra.mxu0 %v280
    %501 = vmatpush.msra.mxu0 %v276
    %502 = vmatpush.msra.mxu0 %v272
    %503 = vmatpush.msra.mxu0 %v268
    %504 = vmatpush.msra.mxu0 %v264
    %505 = vmatpush.msra.mxu0 %v260
    %506 = vmatpush.msra.mxu0 %v256
    %507 = vmatpush.msra.mxu0 %v252
    %508 = vmatpush.msra.mxu0 %v248
    %509 = vmatpush.msra.mxu0 %v244
    %510 = vmatpush.msra.mxu0 %v240
    %511 = vmatpush.msra.mxu0 %v236
    %512 = vmatpush.msra.mxu0 %v232
    %513 = vmatpush.msra.mxu0 %v228
    %514 = vmatmul.f32.gmra.mxu0 %v437
    %v515 = vpop.f32.mrf.mxu0
    %v516 = vadd.f32 0.0, %v515
    %517 = vdwg.mxu0
    %v522 = vrot.slane %v456, 7
    %v523 = vrot.slane %v476, 7
    %v524 = vrot.slane %v496, 7
    %v525 = vrot.slane %v516, 7
    %v530 = vadd.f32 %v163, %v522
    %v531 = vadd.f32 %v183, %v523
    %v532 = vadd.f32 %v203, %v524
    %v533 = vadd.f32 %v223, %v525
    %v534 = vxor.u32 %v530, 2147483648
    %v535 = vmul.f32 %v534, 1.442695
    %v536 = vpow.pop %v535
    %v537 = vadd.f32 %v536, 1.0
    %v538 = vrcp.pop %v537
    %v539 = vmul.f32 %v537, %v538
    %v540 = vsub.f32 1.0, %v539
    %v541 = vmul.f32 %v538, %v540
    %v542 = vadd.f32 %v538, %v541
    %vm543 = vweird.f32 %v537
    %vm544 = vweird.f32 %v538
    %vm545 = vmor %vm543, %vm544
    %v546 = vsel %vm545, %v538, %v542
    %v547 = vand.u32 2147483647, %v537
    %vm548 = vcmp.eq.f32.partialorder %v547, 8.507059e+37
    %v549 = vand.u32 %v537, 2147483648
    %v550 = vor.u32 1.1754944e-38, %v549
    %v551 = vsel %vm548, %v550, %v546
    %v552 = vmul.f32 1.0, %v551
    %v553 = vxor.u32 %v531, 2147483648
    %v554 = vmul.f32 %v553, 1.442695
    %v555 = vpow.pop %v554
    %v556 = vadd.f32 %v555, 1.0
    %v557 = vrcp.pop %v556
    %v558 = vmul.f32 %v556, %v557
    %v559 = vsub.f32 1.0, %v558
    %v560 = vmul.f32 %v557, %v559
    %v561 = vadd.f32 %v557, %v560
    %vm562 = vweird.f32 %v556
    %vm563 = vweird.f32 %v557
    %vm564 = vmor %vm562, %vm563
    %v565 = vsel %vm564, %v557, %v561
    %v566 = vand.u32 2147483647, %v556
    %vm567 = vcmp.eq.f32.partialorder %v566, 8.507059e+37
    %v568 = vand.u32 %v556, 2147483648
    %v569 = vor.u32 1.1754944e-38, %v568
    %v570 = vsel %vm567, %v569, %v565
    %v571 = vmul.f32 1.0, %v570
    %v572 = vtanh.pop %v532
    %v573 = vxor.u32 %v533, 2147483648
    %v574 = vmul.f32 %v573, 1.442695
    %v575 = vpow.pop %v574
    %v576 = vadd.f32 %v575, 1.0
    %v577 = vrcp.pop %v576
    %v578 = vmul.f32 %v576, %v577
    %v579 = vsub.f32 1.0, %v578
    %v580 = vmul.f32 %v577, %v579
    %v581 = vadd.f32 %v577, %v580
    %vm582 = vweird.f32 %v576
    %vm583 = vweird.f32 %v577
    %vm584 = vmor %vm582, %vm583
    %v585 = vsel %vm584, %v577, %v581
    %v586 = vand.u32 2147483647, %v576
    %vm587 = vcmp.eq.f32.partialorder %v586, 8.507059e+37
    %v588 = vand.u32 %v576, 2147483648
    %v589 = vor.u32 1.1754944e-38, %v588
    %v590 = vsel %vm587, %v589, %v585
    %v591 = vmul.f32 1.0, %v590
    %v593 = vrot.slane %v435, 7
    %v595 = vmul.f32 %v571, %v593
    %v596 = vmul.f32 %v552, %v572
    %v597 = vadd.f32 %v595, %v596
    %v598 = vtanh.pop %v597
    %v599 = vmul.f32 %v591, %v598
    %v601 = vrot.slane %v599, 1
    %603 = vmatpush.msra.mxu0 %v285
    %604 = vmatpush.msra.mxu0 %v281
    %605 = vmatpush.msra.mxu0 %v277
    %606 = vmatpush.msra.mxu0 %v273
    %607 = vmatpush.msra.mxu0 %v269
    %608 = vmatpush.msra.mxu0 %v265
    %609 = vmatpush.msra.mxu0 %v261
    %610 = vmatpush.msra.mxu0 %v257
    %611 = vmatpush.msra.mxu0 %v253
    %612 = vmatpush.msra.mxu0 %v249
    %613 = vmatpush.msra.mxu0 %v245
    %614 = vmatpush.msra.mxu0 %v241
    %615 = vmatpush.msra.mxu0 %v237
    %616 = vmatpush.msra.mxu0 %v233
    %617 = vmatpush.msra.mxu0 %v229
    %618 = vmatpush.msra.mxu0 %v225
    %619 = vmatmul.f32.gmra.mxu0 %v601
    %v620 = vpop.f32.mrf.mxu0
    %v621 = vadd.f32 0.0, %v620
    %622 = vdwg.mxu0
    %623 = vmatpush.msra.mxu0 %v286
    %624 = vmatpush.msra.mxu0 %v282
    %625 = vmatpush.msra.mxu0 %v278
    %626 = vmatpush.msra.mxu0 %v274
    %627 = vmatpush.msra.mxu0 %v270
    %628 = vmatpush.msra.mxu0 %v266
    %629 = vmatpush.msra.mxu0 %v262
    %630 = vmatpush.msra.mxu0 %v258
    %631 = vmatpush.msra.mxu0 %v254
    %632 = vmatpush.msra.mxu0 %v250
    %633 = vmatpush.msra.mxu0 %v246
    %634 = vmatpush.msra.mxu0 %v242
    %635 = vmatpush.msra.mxu0 %v238
    %636 = vmatpush.msra.mxu0 %v234
    %637 = vmatpush.msra.mxu0 %v230
    %638 = vmatpush.msra.mxu0 %v226
    %639 = vmatmul.f32.gmra.mxu0 %v601
    %v640 = vpop.f32.mrf.mxu0
    %v641 = vadd.f32 0.0, %v640
    %642 = vdwg.mxu0
    %643 = vmatpush.msra.mxu0 %v287
    %644 = vmatpush.msra.mxu0 %v283
    %645 = vmatpush.msra.mxu0 %v279
    %646 = vmatpush.msra.mxu0 %v275
    %647 = vmatpush.msra.mxu0 %v271
    %648 = vmatpush.msra.mxu0 %v267
    %649 = vmatpush.msra.mxu0 %v263
    %650 = vmatpush.msra.mxu0 %v259
    %651 = vmatpush.msra.mxu0 %v255
    %652 = vmatpush.msra.mxu0 %v251
    %653 = vmatpush.msra.mxu0 %v247
    %654 = vmatpush.msra.mxu0 %v243
    %655 = vmatpush.msra.mxu0 %v239
    %656 = vmatpush.msra.mxu0 %v235
    %657 = vmatpush.msra.mxu0 %v231
    %658 = vmatpush.msra.mxu0 %v227
    %659 = vmatmul.f32.gmra.mxu0 %v601
    %v660 = vpop.f32.mrf.mxu0
    %v661 = vadd.f32 0.0, %v660
    %662 = vdwg.mxu0
    %663 = vmatpush.msra.mxu0 %v288
    %664 = vmatpush.msra.mxu0 %v284
    %665 = vmatpush.msra.mxu0 %v280
    %666 = vmatpush.msra.mxu0 %v276
    %667 = vmatpush.msra.mxu0 %v272
    %668 = vmatpush.msra.mxu0 %v268
    %669 = vmatpush.msra.mxu0 %v264
    %670 = vmatpush.msra.mxu0 %v260
    %671 = vmatpush.msra.mxu0 %v256
    %672 = vmatpush.msra.mxu0 %v252
    %673 = vmatpush.msra.mxu0 %v248
    %674 = vmatpush.msra.mxu0 %v244
    %675 = vmatpush.msra.mxu0 %v240
    %676 = vmatpush.msra.mxu0 %v236
    %677 = vmatpush.msra.mxu0 %v232
    %678 = vmatpush.msra.mxu0 %v228
    %679 = vmatmul.f32.gmra.mxu0 %v601
    %v680 = vpop.f32.mrf.mxu0
    %v681 = vadd.f32 0.0, %v680
    %682 = vdwg.mxu0
    %v687 = vrot.slane %v621, 6
    %v688 = vrot.slane %v641, 6
    %v689 = vrot.slane %v661, 6
    %v690 = vrot.slane %v681, 6
    %v695 = vadd.f32 %v163, %v687
    %v696 = vadd.f32 %v183, %v688
    %v697 = vadd.f32 %v203, %v689
    %v698 = vadd.f32 %v223, %v690
    %v699 = vxor.u32 %v695, 2147483648
    %v700 = vmul.f32 %v699, 1.442695
    %v701 = vpow.pop %v700
    %v702 = vadd.f32 %v701, 1.0
    %v703 = vrcp.pop %v702
    %v704 = vmul.f32 %v702, %v703
    %v705 = vsub.f32 1.0, %v704
    %v706 = vmul.f32 %v703, %v705
    %v707 = vadd.f32 %v703, %v706
    %vm708 = vweird.f32 %v702
    %vm709 = vweird.f32 %v703
    %vm710 = vmor %vm708, %vm709
    %v711 = vsel %vm710, %v703, %v707
    %v712 = vand.u32 2147483647, %v702
    %vm713 = vcmp.eq.f32.partialorder %v712, 8.507059e+37
    %v714 = vand.u32 %v702, 2147483648
    %v715 = vor.u32 1.1754944e-38, %v714
    %v716 = vsel %vm713, %v715, %v711
    %v717 = vmul.f32 1.0, %v716
    %v718 = vxor.u32 %v696, 2147483648
    %v719 = vmul.f32 %v718, 1.442695
    %v720 = vpow.pop %v719
    %v721 = vadd.f32 %v720, 1.0
    %v722 = vrcp.pop %v721
    %v723 = vmul.f32 %v721, %v722
    %v724 = vsub.f32 1.0, %v723
    %v725 = vmul.f32 %v722, %v724
    %v726 = vadd.f32 %v722, %v725
    %vm727 = vweird.f32 %v721
    %vm728 = vweird.f32 %v722
    %vm729 = vmor %vm727, %vm728
    %v730 = vsel %vm729, %v722, %v726
    %v731 = vand.u32 2147483647, %v721
    %vm732 = vcmp.eq.f32.partialorder %v731, 8.507059e+37
    %v733 = vand.u32 %v721, 2147483648
    %v734 = vor.u32 1.1754944e-38, %v733
    %v735 = vsel %vm732, %v734, %v730
    %v736 = vmul.f32 1.0, %v735
    %v737 = vtanh.pop %v697
    %v738 = vxor.u32 %v698, 2147483648
    %v739 = vmul.f32 %v738, 1.442695
    %v740 = vpow.pop %v739
    %v741 = vadd.f32 %v740, 1.0
    %v742 = vrcp.pop %v741
    %v743 = vmul.f32 %v741, %v742
    %v744 = vsub.f32 1.0, %v743
    %v745 = vmul.f32 %v742, %v744
    %v746 = vadd.f32 %v742, %v745
    %vm747 = vweird.f32 %v741
    %vm748 = vweird.f32 %v742
    %vm749 = vmor %vm747, %vm748
    %v750 = vsel %vm749, %v742, %v746
    %v751 = vand.u32 2147483647, %v741
    %vm752 = vcmp.eq.f32.partialorder %v751, 8.507059e+37
    %v753 = vand.u32 %v741, 2147483648
    %v754 = vor.u32 1.1754944e-38, %v753
    %v755 = vsel %vm752, %v754, %v750
    %v756 = vmul.f32 1.0, %v755
    %v758 = vrot.slane %v597, 7
    %v760 = vmul.f32 %v736, %v758
    %v761 = vmul.f32 %v717, %v737
    %v762 = vadd.f32 %v760, %v761
    %v763 = vtanh.pop %v762
    %v764 = vmul.f32 %v756, %v763
    %v766 = vrot.slane %v764, 2
    %768 = vmatpush.msra.mxu0 %v285
    %769 = vmatpush.msra.mxu0 %v281
    %770 = vmatpush.msra.mxu0 %v277
    %771 = vmatpush.msra.mxu0 %v273
    %772 = vmatpush.msra.mxu0 %v269
    %773 = vmatpush.msra.mxu0 %v265
    %774 = vmatpush.msra.mxu0 %v261
    %775 = vmatpush.msra.mxu0 %v257
    %776 = vmatpush.msra.mxu0 %v253
    %777 = vmatpush.msra.mxu0 %v249
    %778 = vmatpush.msra.mxu0 %v245
    %779 = vmatpush.msra.mxu0 %v241
    %780 = vmatpush.msra.mxu0 %v237
    %781 = vmatpush.msra.mxu0 %v233
    %782 = vmatpush.msra.mxu0 %v229
    %783 = vmatpush.msra.mxu0 %v225
    %784 = vmatmul.f32.gmra.mxu0 %v766
    %v785 = vpop.f32.mrf.mxu0
    %v786 = vadd.f32 0.0, %v785
    %787 = vdwg.mxu0
    %788 = vmatpush.msra.mxu0 %v286
    %789 = vmatpush.msra.mxu0 %v282
    %790 = vmatpush.msra.mxu0 %v278
    %791 = vmatpush.msra.mxu0 %v274
    %792 = vmatpush.msra.mxu0 %v270
    %793 = vmatpush.msra.mxu0 %v266
    %794 = vmatpush.msra.mxu0 %v262
    %795 = vmatpush.msra.mxu0 %v258
    %796 = vmatpush.msra.mxu0 %v254
    %797 = vmatpush.msra.mxu0 %v250
    %798 = vmatpush.msra.mxu0 %v246
    %799 = vmatpush.msra.mxu0 %v242
    %800 = vmatpush.msra.mxu0 %v238
    %801 = vmatpush.msra.mxu0 %v234
    %802 = vmatpush.msra.mxu0 %v230
    %803 = vmatpush.msra.mxu0 %v226
    %804 = vmatmul.f32.gmra.mxu0 %v766
    %v805 = vpop.f32.mrf.mxu0
    %v806 = vadd.f32 0.0, %v805
    %807 = vdwg.mxu0
    %808 = vmatpush.msra.mxu0 %v287
    %809 = vmatpush.msra.mxu0 %v283
    %810 = vmatpush.msra.mxu0 %v279
    %811 = vmatpush.msra.mxu0 %v275
    %812 = vmatpush.msra.mxu0 %v271
    %813 = vmatpush.msra.mxu0 %v267
    %814 = vmatpush.msra.mxu0 %v263
    %815 = vmatpush.msra.mxu0 %v259
    %816 = vmatpush.msra.mxu0 %v255
    %817 = vmatpush.msra.mxu0 %v251
    %818 = vmatpush.msra.mxu0 %v247
    %819 = vmatpush.msra.mxu0 %v243
    %820 = vmatpush.msra.mxu0 %v239
    %821 = vmatpush.msra.mxu0 %v235
    %822 = vmatpush.msra.mxu0 %v231
    %823 = vmatpush.msra.mxu0 %v227
    %824 = vmatmul.f32.gmra.mxu0 %v766
    %v825 = vpop.f32.mrf.mxu0
    %v826 = vadd.f32 0.0, %v825
    %827 = vdwg.mxu0
    %828 = vmatpush.msra.mxu0 %v288
    %829 = vmatpush.msra.mxu0 %v284
    %830 = vmatpush.msra.mxu0 %v280
    %831 = vmatpush.msra.mxu0 %v276
    %832 = vmatpush.msra.mxu0 %v272
    %833 = vmatpush.msra.mxu0 %v268
    %834 = vmatpush.msra.mxu0 %v264
    %835 = vmatpush.msra.mxu0 %v260
    %836 = vmatpush.msra.mxu0 %v256
    %837 = vmatpush.msra.mxu0 %v252
    %838 = vmatpush.msra.mxu0 %v248
    %839 = vmatpush.msra.mxu0 %v244
    %840 = vmatpush.msra.mxu0 %v240
    %841 = vmatpush.msra.mxu0 %v236
    %842 = vmatpush.msra.mxu0 %v232
    %843 = vmatpush.msra.mxu0 %v228
    %844 = vmatmul.f32.gmra.mxu0 %v766
    %v845 = vpop.f32.mrf.mxu0
    %v846 = vadd.f32 0.0, %v845
    %847 = vdwg.mxu0
    %v852 = vrot.slane %v786, 5
    %v853 = vrot.slane %v806, 5
    %v854 = vrot.slane %v826, 5
    %v855 = vrot.slane %v846, 5
    %v860 = vadd.f32 %v163, %v852
    %v861 = vadd.f32 %v183, %v853
    %v862 = vadd.f32 %v203, %v854
    %v863 = vadd.f32 %v223, %v855
    %v864 = vxor.u32 %v860, 2147483648
    %v865 = vmul.f32 %v864, 1.442695
    %v866 = vpow.pop %v865
    %v867 = vadd.f32 %v866, 1.0
    %v868 = vrcp.pop %v867
    %v869 = vmul.f32 %v867, %v868
    %v870 = vsub.f32 1.0, %v869
    %v871 = vmul.f32 %v868, %v870
    %v872 = vadd.f32 %v868, %v871
    %vm873 = vweird.f32 %v867
    %vm874 = vweird.f32 %v868
    %vm875 = vmor %vm873, %vm874
    %v876 = vsel %vm875, %v868, %v872
    %v877 = vand.u32 2147483647, %v867
    %vm878 = vcmp.eq.f32.partialorder %v877, 8.507059e+37
    %v879 = vand.u32 %v867, 2147483648
    %v880 = vor.u32 1.1754944e-38, %v879
    %v881 = vsel %vm878, %v880, %v876
    %v882 = vmul.f32 1.0, %v881
    %v883 = vxor.u32 %v861, 2147483648
    %v884 = vmul.f32 %v883, 1.442695
    %v885 = vpow.pop %v884
    %v886 = vadd.f32 %v885, 1.0
    %v887 = vrcp.pop %v886
    %v888 = vmul.f32 %v886, %v887
    %v889 = vsub.f32 1.0, %v888
    %v890 = vmul.f32 %v887, %v889
    %v891 = vadd.f32 %v887, %v890
    %vm892 = vweird.f32 %v886
    %vm893 = vweird.f32 %v887
    %vm894 = vmor %vm892, %vm893
    %v895 = vsel %vm894, %v887, %v891
    %v896 = vand.u32 2147483647, %v886
    %vm897 = vcmp.eq.f32.partialorder %v896, 8.507059e+37
    %v898 = vand.u32 %v886, 2147483648
    %v899 = vor.u32 1.1754944e-38, %v898
    %v900 = vsel %vm897, %v899, %v895
    %v901 = vmul.f32 1.0, %v900
    %v902 = vtanh.pop %v862
    %v903 = vxor.u32 %v863, 2147483648
    %v904 = vmul.f32 %v903, 1.442695
    %v905 = vpow.pop %v904
    %v906 = vadd.f32 %v905, 1.0
    %v907 = vrcp.pop %v906
    %v908 = vmul.f32 %v906, %v907
    %v909 = vsub.f32 1.0, %v908
    %v910 = vmul.f32 %v907, %v909
    %v911 = vadd.f32 %v907, %v910
    %vm912 = vweird.f32 %v906
    %vm913 = vweird.f32 %v907
    %vm914 = vmor %vm912, %vm913
    %v915 = vsel %vm914, %v907, %v911
    %v916 = vand.u32 2147483647, %v906
    %vm917 = vcmp.eq.f32.partialorder %v916, 8.507059e+37
    %v918 = vand.u32 %v906, 2147483648
    %v919 = vor.u32 1.1754944e-38, %v918
    %v920 = vsel %vm917, %v919, %v915
    %v921 = vmul.f32 1.0, %v920
    %v923 = vrot.slane %v762, 7
    %v925 = vmul.f32 %v901, %v923
    %v926 = vmul.f32 %v882, %v902
    %v927 = vadd.f32 %v925, %v926
    %v928 = vtanh.pop %v927
    %v929 = vmul.f32 %v921, %v928
    %v931 = vrot.slane %v929, 3
    %933 = vmatpush.msra.mxu0 %v285
    %934 = vmatpush.msra.mxu0 %v281
    %935 = vmatpush.msra.mxu0 %v277
    %936 = vmatpush.msra.mxu0 %v273
    %937 = vmatpush.msra.mxu0 %v269
    %938 = vmatpush.msra.mxu0 %v265
    %939 = vmatpush.msra.mxu0 %v261
    %940 = vmatpush.msra.mxu0 %v257
    %941 = vmatpush.msra.mxu0 %v253
    %942 = vmatpush.msra.mxu0 %v249
    %943 = vmatpush.msra.mxu0 %v245
    %944 = vmatpush.msra.mxu0 %v241
    %945 = vmatpush.msra.mxu0 %v237
    %946 = vmatpush.msra.mxu0 %v233
    %947 = vmatpush.msra.mxu0 %v229
    %948 = vmatpush.msra.mxu0 %v225
    %949 = vmatmul.f32.gmra.mxu0 %v931
    %v950 = vpop.f32.mrf.mxu0
    %v951 = vadd.f32 0.0, %v950
    %952 = vdwg.mxu0
    %953 = vmatpush.msra.mxu0 %v286
    %954 = vmatpush.msra.mxu0 %v282
    %955 = vmatpush.msra.mxu0 %v278
    %956 = vmatpush.msra.mxu0 %v274
    %957 = vmatpush.msra.mxu0 %v270
    %958 = vmatpush.msra.mxu0 %v266
    %959 = vmatpush.msra.mxu0 %v262
    %960 = vmatpush.msra.mxu0 %v258
    %961 = vmatpush.msra.mxu0 %v254
    %962 = vmatpush.msra.mxu0 %v250
    %963 = vmatpush.msra.mxu0 %v246
    %964 = vmatpush.msra.mxu0 %v242
    %965 = vmatpush.msra.mxu0 %v238
    %966 = vmatpush.msra.mxu0 %v234
    %967 = vmatpush.msra.mxu0 %v230
    %968 = vmatpush.msra.mxu0 %v226
    %969 = vmatmul.f32.gmra.mxu0 %v931
    %v970 = vpop.f32.mrf.mxu0
    %v971 = vadd.f32 0.0, %v970
    %972 = vdwg.mxu0
    %973 = vmatpush.msra.mxu0 %v287
    %974 = vmatpush.msra.mxu0 %v283
    %975 = vmatpush.msra.mxu0 %v279
    %976 = vmatpush.msra.mxu0 %v275
    %977 = vmatpush.msra.mxu0 %v271
    %978 = vmatpush.msra.mxu0 %v267
    %979 = vmatpush.msra.mxu0 %v263
    %980 = vmatpush.msra.mxu0 %v259
    %981 = vmatpush.msra.mxu0 %v255
    %982 = vmatpush.msra.mxu0 %v251
    %983 = vmatpush.msra.mxu0 %v247
    %984 = vmatpush.msra.mxu0 %v243
    %985 = vmatpush.msra.mxu0 %v239
    %986 = vmatpush.msra.mxu0 %v235
    %987 = vmatpush.msra.mxu0 %v231
    %988 = vmatpush.msra.mxu0 %v227
    %989 = vmatmul.f32.gmra.mxu0 %v931
    %v990 = vpop.f32.mrf.mxu0
    %v991 = vadd.f32 0.0, %v990
    %992 = vdwg.mxu0
    %993 = vmatpush.msra.mxu0 %v288
    %994 = vmatpush.msra.mxu0 %v284
    %995 = vmatpush.msra.mxu0 %v280
    %996 = vmatpush.msra.mxu0 %v276
    %997 = vmatpush.msra.mxu0 %v272
    %998 = vmatpush.msra.mxu0 %v268
    %999 = vmatpush.msra.mxu0 %v264
    %1000 = vmatpush.msra.mxu0 %v260
    %1001 = vmatpush.msra.mxu0 %v256
    %1002 = vmatpush.msra.mxu0 %v252
    %1003 = vmatpush.msra.mxu0 %v248
    %1004 = vmatpush.msra.mxu0 %v244
    %1005 = vmatpush.msra.mxu0 %v240
    %1006 = vmatpush.msra.mxu0 %v236
    %1007 = vmatpush.msra.mxu0 %v232
    %1008 = vmatpush.msra.mxu0 %v228
    %1009 = vmatmul.f32.gmra.mxu0 %v931
    %v1010 = vpop.f32.mrf.mxu0
    %v1011 = vadd.f32 0.0, %v1010
    %1012 = vdwg.mxu0
    %v1017 = vrot.slane %v951, 4
    %v1018 = vrot.slane %v971, 4
    %v1019 = vrot.slane %v991, 4
    %v1020 = vrot.slane %v1011, 4
    %v1025 = vadd.f32 %v163, %v1017
    %v1026 = vadd.f32 %v183, %v1018
    %v1027 = vadd.f32 %v203, %v1019
    %v1028 = vadd.f32 %v223, %v1020
    %v1029 = vxor.u32 %v1025, 2147483648
    %v1030 = vmul.f32 %v1029, 1.442695
    %v1031 = vpow.pop %v1030
    %v1032 = vadd.f32 %v1031, 1.0
    %v1033 = vrcp.pop %v1032
    %v1034 = vmul.f32 %v1032, %v1033
    %v1035 = vsub.f32 1.0, %v1034
    %v1036 = vmul.f32 %v1033, %v1035
    %v1037 = vadd.f32 %v1033, %v1036
    %vm1038 = vweird.f32 %v1032
    %vm1039 = vweird.f32 %v1033
    %vm1040 = vmor %vm1038, %vm1039
    %v1041 = vsel %vm1040, %v1033, %v1037
    %v1042 = vand.u32 2147483647, %v1032
    %vm1043 = vcmp.eq.f32.partialorder %v1042, 8.507059e+37
    %v1044 = vand.u32 %v1032, 2147483648
    %v1045 = vor.u32 1.1754944e-38, %v1044
    %v1046 = vsel %vm1043, %v1045, %v1041
    %v1047 = vmul.f32 1.0, %v1046
    %v1048 = vxor.u32 %v1026, 2147483648
    %v1049 = vmul.f32 %v1048, 1.442695
    %v1050 = vpow.pop %v1049
    %v1051 = vadd.f32 %v1050, 1.0
    %v1052 = vrcp.pop %v1051
    %v1053 = vmul.f32 %v1051, %v1052
    %v1054 = vsub.f32 1.0, %v1053
    %v1055 = vmul.f32 %v1052, %v1054
    %v1056 = vadd.f32 %v1052, %v1055
    %vm1057 = vweird.f32 %v1051
    %vm1058 = vweird.f32 %v1052
    %vm1059 = vmor %vm1057, %vm1058
    %v1060 = vsel %vm1059, %v1052, %v1056
    %v1061 = vand.u32 2147483647, %v1051
    %vm1062 = vcmp.eq.f32.partialorder %v1061, 8.507059e+37
    %v1063 = vand.u32 %v1051, 2147483648
    %v1064 = vor.u32 1.1754944e-38, %v1063
    %v1065 = vsel %vm1062, %v1064, %v1060
    %v1066 = vmul.f32 1.0, %v1065
    %v1067 = vtanh.pop %v1027
    %v1068 = vxor.u32 %v1028, 2147483648
    %v1069 = vmul.f32 %v1068, 1.442695
    %v1070 = vpow.pop %v1069
    %v1071 = vadd.f32 %v1070, 1.0
    %v1072 = vrcp.pop %v1071
    %v1073 = vmul.f32 %v1071, %v1072
    %v1074 = vsub.f32 1.0, %v1073
    %v1075 = vmul.f32 %v1072, %v1074
    %v1076 = vadd.f32 %v1072, %v1075
    %vm1077 = vweird.f32 %v1071
    %vm1078 = vweird.f32 %v1072
    %vm1079 = vmor %vm1077, %vm1078
    %v1080 = vsel %vm1079, %v1072, %v1076
    %v1081 = vand.u32 2147483647, %v1071
    %vm1082 = vcmp.eq.f32.partialorder %v1081, 8.507059e+37
    %v1083 = vand.u32 %v1071, 2147483648
    %v1084 = vor.u32 1.1754944e-38, %v1083
    %v1085 = vsel %vm1082, %v1084, %v1080
    %v1086 = vmul.f32 1.0, %v1085
    %v1088 = vrot.slane %v927, 7
    %v1090 = vmul.f32 %v1066, %v1088
    %v1091 = vmul.f32 %v1047, %v1067
    %v1092 = vadd.f32 %v1090, %v1091
    %v1093 = vtanh.pop %v1092
    %v1094 = vmul.f32 %v1086, %v1093
    %v1096 = vrot.slane %v1094, 4
    %1098 = vmatpush.msra.mxu0 %v285
    %1099 = vmatpush.msra.mxu0 %v281
    %1100 = vmatpush.msra.mxu0 %v277
    %1101 = vmatpush.msra.mxu0 %v273
    %1102 = vmatpush.msra.mxu0 %v269
    %1103 = vmatpush.msra.mxu0 %v265
    %1104 = vmatpush.msra.mxu0 %v261
    %1105 = vmatpush.msra.mxu0 %v257
    %1106 = vmatpush.msra.mxu0 %v253
    %1107 = vmatpush.msra.mxu0 %v249
    %1108 = vmatpush.msra.mxu0 %v245
    %1109 = vmatpush.msra.mxu0 %v241
    %1110 = vmatpush.msra.mxu0 %v237
    %1111 = vmatpush.msra.mxu0 %v233
    %1112 = vmatpush.msra.mxu0 %v229
    %1113 = vmatpush.msra.mxu0 %v225
    %1114 = vmatmul.f32.gmra.mxu0 %v1096
    %v1115 = vpop.f32.mrf.mxu0
    %v1116 = vadd.f32 0.0, %v1115
    %1117 = vdwg.mxu0
    %1118 = vmatpush.msra.mxu0 %v286
    %1119 = vmatpush.msra.mxu0 %v282
    %1120 = vmatpush.msra.mxu0 %v278
    %1121 = vmatpush.msra.mxu0 %v274
    %1122 = vmatpush.msra.mxu0 %v270
    %1123 = vmatpush.msra.mxu0 %v266
    %1124 = vmatpush.msra.mxu0 %v262
    %1125 = vmatpush.msra.mxu0 %v258
    %1126 = vmatpush.msra.mxu0 %v254
    %1127 = vmatpush.msra.mxu0 %v250
    %1128 = vmatpush.msra.mxu0 %v246
    %1129 = vmatpush.msra.mxu0 %v242
    %1130 = vmatpush.msra.mxu0 %v238
    %1131 = vmatpush.msra.mxu0 %v234
    %1132 = vmatpush.msra.mxu0 %v230
    %1133 = vmatpush.msra.mxu0 %v226
    %1134 = vmatmul.f32.gmra.mxu0 %v1096
    %v1135 = vpop.f32.mrf.mxu0
    %v1136 = vadd.f32 0.0, %v1135
    %1137 = vdwg.mxu0
    %1138 = vmatpush.msra.mxu0 %v287
    %1139 = vmatpush.msra.mxu0 %v283
    %1140 = vmatpush.msra.mxu0 %v279
    %1141 = vmatpush.msra.mxu0 %v275
    %1142 = vmatpush.msra.mxu0 %v271
    %1143 = vmatpush.msra.mxu0 %v267
    %1144 = vmatpush.msra.mxu0 %v263
    %1145 = vmatpush.msra.mxu0 %v259
    %1146 = vmatpush.msra.mxu0 %v255
    %1147 = vmatpush.msra.mxu0 %v251
    %1148 = vmatpush.msra.mxu0 %v247
    %1149 = vmatpush.msra.mxu0 %v243
    %1150 = vmatpush.msra.mxu0 %v239
    %1151 = vmatpush.msra.mxu0 %v235
    %1152 = vmatpush.msra.mxu0 %v231
    %1153 = vmatpush.msra.mxu0 %v227
    %1154 = vmatmul.f32.gmra.mxu0 %v1096
    %v1155 = vpop.f32.mrf.mxu0
    %v1156 = vadd.f32 0.0, %v1155
    %1157 = vdwg.mxu0
    %1158 = vmatpush.msra.mxu0 %v288
    %1159 = vmatpush.msra.mxu0 %v284
    %1160 = vmatpush.msra.mxu0 %v280
    %1161 = vmatpush.msra.mxu0 %v276
    %1162 = vmatpush.msra.mxu0 %v272
    %1163 = vmatpush.msra.mxu0 %v268
    %1164 = vmatpush.msra.mxu0 %v264
    %1165 = vmatpush.msra.mxu0 %v260
    %1166 = vmatpush.msra.mxu0 %v256
    %1167 = vmatpush.msra.mxu0 %v252
    %1168 = vmatpush.msra.mxu0 %v248
    %1169 = vmatpush.msra.mxu0 %v244
    %1170 = vmatpush.msra.mxu0 %v240
    %1171 = vmatpush.msra.mxu0 %v236
    %1172 = vmatpush.msra.mxu0 %v232
    %1173 = vmatpush.msra.mxu0 %v228
    %1174 = vmatmul.f32.gmra.mxu0 %v1096
    %v1175 = vpop.f32.mrf.mxu0
    %v1176 = vadd.f32 0.0, %v1175
    %1177 = vdwg.mxu0
    %v1182 = vrot.slane %v1116, 3
    %v1183 = vrot.slane %v1136, 3
    %v1184 = vrot.slane %v1156, 3
    %v1185 = vrot.slane %v1176, 3
    %v1190 = vadd.f32 %v163, %v1182
    %v1191 = vadd.f32 %v183, %v1183
    %v1192 = vadd.f32 %v203, %v1184
    %v1193 = vadd.f32 %v223, %v1185
    %v1194 = vxor.u32 %v1190, 2147483648
    %v1195 = vmul.f32 %v1194, 1.442695
    %v1196 = vpow.pop %v1195
    %v1197 = vadd.f32 %v1196, 1.0
    %v1198 = vrcp.pop %v1197
    %v1199 = vmul.f32 %v1197, %v1198
    %v1200 = vsub.f32 1.0, %v1199
    %v1201 = vmul.f32 %v1198, %v1200
    %v1202 = vadd.f32 %v1198, %v1201
    %vm1203 = vweird.f32 %v1197
    %vm1204 = vweird.f32 %v1198
    %vm1205 = vmor %vm1203, %vm1204
    %v1206 = vsel %vm1205, %v1198, %v1202
    %v1207 = vand.u32 2147483647, %v1197
    %vm1208 = vcmp.eq.f32.partialorder %v1207, 8.507059e+37
    %v1209 = vand.u32 %v1197, 2147483648
    %v1210 = vor.u32 1.1754944e-38, %v1209
    %v1211 = vsel %vm1208, %v1210, %v1206
    %v1212 = vmul.f32 1.0, %v1211
    %v1213 = vxor.u32 %v1191, 2147483648
    %v1214 = vmul.f32 %v1213, 1.442695
    %v1215 = vpow.pop %v1214
    %v1216 = vadd.f32 %v1215, 1.0
    %v1217 = vrcp.pop %v1216
    %v1218 = vmul.f32 %v1216, %v1217
    %v1219 = vsub.f32 1.0, %v1218
    %v1220 = vmul.f32 %v1217, %v1219
    %v1221 = vadd.f32 %v1217, %v1220
    %vm1222 = vweird.f32 %v1216
    %vm1223 = vweird.f32 %v1217
    %vm1224 = vmor %vm1222, %vm1223
    %v1225 = vsel %vm1224, %v1217, %v1221
    %v1226 = vand.u32 2147483647, %v1216
    %vm1227 = vcmp.eq.f32.partialorder %v1226, 8.507059e+37
    %v1228 = vand.u32 %v1216, 2147483648
    %v1229 = vor.u32 1.1754944e-38, %v1228
    %v1230 = vsel %vm1227, %v1229, %v1225
    %v1231 = vmul.f32 1.0, %v1230
    %v1232 = vtanh.pop %v1192
    %v1233 = vxor.u32 %v1193, 2147483648
    %v1234 = vmul.f32 %v1233, 1.442695
    %v1235 = vpow.pop %v1234
    %v1236 = vadd.f32 %v1235, 1.0
    %v1237 = vrcp.pop %v1236
    %v1238 = vmul.f32 %v1236, %v1237
    %v1239 = vsub.f32 1.0, %v1238
    %v1240 = vmul.f32 %v1237, %v1239
    %v1241 = vadd.f32 %v1237, %v1240
    %vm1242 = vweird.f32 %v1236
    %vm1243 = vweird.f32 %v1237
    %vm1244 = vmor %vm1242, %vm1243
    %v1245 = vsel %vm1244, %v1237, %v1241
    %v1246 = vand.u32 2147483647, %v1236
    %vm1247 = vcmp.eq.f32.partialorder %v1246, 8.507059e+37
    %v1248 = vand.u32 %v1236, 2147483648
    %v1249 = vor.u32 1.1754944e-38, %v1248
    %v1250 = vsel %vm1247, %v1249, %v1245
    %v1251 = vmul.f32 1.0, %v1250
    %v1253 = vrot.slane %v1092, 7
    %v1255 = vmul.f32 %v1231, %v1253
    %v1256 = vmul.f32 %v1212, %v1232
    %v1257 = vadd.f32 %v1255, %v1256
    %v1258 = vtanh.pop %v1257
    %v1259 = vmul.f32 %v1251, %v1258
    %v1261 = vrot.slane %v1259, 5
    %1263 = vmatpush.msra.mxu0 %v285
    %1264 = vmatpush.msra.mxu0 %v281
    %1265 = vmatpush.msra.mxu0 %v277
    %1266 = vmatpush.msra.mxu0 %v273
    %1267 = vmatpush.msra.mxu0 %v269
    %1268 = vmatpush.msra.mxu0 %v265
    %1269 = vmatpush.msra.mxu0 %v261
    %1270 = vmatpush.msra.mxu0 %v257
    %1271 = vmatpush.msra.mxu0 %v253
    %1272 = vmatpush.msra.mxu0 %v249
    %1273 = vmatpush.msra.mxu0 %v245
    %1274 = vmatpush.msra.mxu0 %v241
    %1275 = vmatpush.msra.mxu0 %v237
    %1276 = vmatpush.msra.mxu0 %v233
    %1277 = vmatpush.msra.mxu0 %v229
    %1278 = vmatpush.msra.mxu0 %v225
    %1279 = vmatmul.f32.gmra.mxu0 %v1261
    %v1280 = vpop.f32.mrf.mxu0
    %v1281 = vadd.f32 0.0, %v1280
    %1282 = vdwg.mxu0
    %1283 = vmatpush.msra.mxu0 %v286
    %1284 = vmatpush.msra.mxu0 %v282
    %1285 = vmatpush.msra.mxu0 %v278
    %1286 = vmatpush.msra.mxu0 %v274
    %1287 = vmatpush.msra.mxu0 %v270
    %1288 = vmatpush.msra.mxu0 %v266
    %1289 = vmatpush.msra.mxu0 %v262
    %1290 = vmatpush.msra.mxu0 %v258
    %1291 = vmatpush.msra.mxu0 %v254
    %1292 = vmatpush.msra.mxu0 %v250
    %1293 = vmatpush.msra.mxu0 %v246
    %1294 = vmatpush.msra.mxu0 %v242
    %1295 = vmatpush.msra.mxu0 %v238
    %1296 = vmatpush.msra.mxu0 %v234
    %1297 = vmatpush.msra.mxu0 %v230
    %1298 = vmatpush.msra.mxu0 %v226
    %1299 = vmatmul.f32.gmra.mxu0 %v1261
    %v1300 = vpop.f32.mrf.mxu0
    %v1301 = vadd.f32 0.0, %v1300
    %1302 = vdwg.mxu0
    %1303 = vmatpush.msra.mxu0 %v287
    %1304 = vmatpush.msra.mxu0 %v283
    %1305 = vmatpush.msra.mxu0 %v279
    %1306 = vmatpush.msra.mxu0 %v275
    %1307 = vmatpush.msra.mxu0 %v271
    %1308 = vmatpush.msra.mxu0 %v267
    %1309 = vmatpush.msra.mxu0 %v263
    %1310 = vmatpush.msra.mxu0 %v259
    %1311 = vmatpush.msra.mxu0 %v255
    %1312 = vmatpush.msra.mxu0 %v251
    %1313 = vmatpush.msra.mxu0 %v247
    %1314 = vmatpush.msra.mxu0 %v243
    %1315 = vmatpush.msra.mxu0 %v239
    %1316 = vmatpush.msra.mxu0 %v235
    %1317 = vmatpush.msra.mxu0 %v231
    %1318 = vmatpush.msra.mxu0 %v227
    %1319 = vmatmul.f32.gmra.mxu0 %v1261
    %v1320 = vpop.f32.mrf.mxu0
    %v1321 = vadd.f32 0.0, %v1320
    %1322 = vdwg.mxu0
    %1323 = vmatpush.msra.mxu0 %v288
    %1324 = vmatpush.msra.mxu0 %v284
    %1325 = vmatpush.msra.mxu0 %v280
    %1326 = vmatpush.msra.mxu0 %v276
    %1327 = vmatpush.msra.mxu0 %v272
    %1328 = vmatpush.msra.mxu0 %v268
    %1329 = vmatpush.msra.mxu0 %v264
    %1330 = vmatpush.msra.mxu0 %v260
    %1331 = vmatpush.msra.mxu0 %v256
    %1332 = vmatpush.msra.mxu0 %v252
    %1333 = vmatpush.msra.mxu0 %v248
    %1334 = vmatpush.msra.mxu0 %v244
    %1335 = vmatpush.msra.mxu0 %v240
    %1336 = vmatpush.msra.mxu0 %v236
    %1337 = vmatpush.msra.mxu0 %v232
    %1338 = vmatpush.msra.mxu0 %v228
    %1339 = vmatmul.f32.gmra.mxu0 %v1261
    %v1340 = vpop.f32.mrf.mxu0
    %v1341 = vadd.f32 0.0, %v1340
    %1342 = vdwg.mxu0
    %v1347 = vrot.slane %v1281, 2
    %v1348 = vrot.slane %v1301, 2
    %v1349 = vrot.slane %v1321, 2
    %v1350 = vrot.slane %v1341, 2
    %v1355 = vadd.f32 %v163, %v1347
    %v1356 = vadd.f32 %v183, %v1348
    %v1357 = vadd.f32 %v203, %v1349
    %v1358 = vadd.f32 %v223, %v1350
    %v1359 = vxor.u32 %v1355, 2147483648
    %v1360 = vmul.f32 %v1359, 1.442695
    %v1361 = vpow.pop %v1360
    %v1362 = vadd.f32 %v1361, 1.0
    %v1363 = vrcp.pop %v1362
    %v1364 = vmul.f32 %v1362, %v1363
    %v1365 = vsub.f32 1.0, %v1364
    %v1366 = vmul.f32 %v1363, %v1365
    %v1367 = vadd.f32 %v1363, %v1366
    %vm1368 = vweird.f32 %v1362
    %vm1369 = vweird.f32 %v1363
    %vm1370 = vmor %vm1368, %vm1369
    %v1371 = vsel %vm1370, %v1363, %v1367
    %v1372 = vand.u32 2147483647, %v1362
    %vm1373 = vcmp.eq.f32.partialorder %v1372, 8.507059e+37
    %v1374 = vand.u32 %v1362, 2147483648
    %v1375 = vor.u32 1.1754944e-38, %v1374
    %v1376 = vsel %vm1373, %v1375, %v1371
    %v1377 = vmul.f32 1.0, %v1376
    %v1378 = vxor.u32 %v1356, 2147483648
    %v1379 = vmul.f32 %v1378, 1.442695
    %v1380 = vpow.pop %v1379
    %v1381 = vadd.f32 %v1380, 1.0
    %v1382 = vrcp.pop %v1381
    %v1383 = vmul.f32 %v1381, %v1382
    %v1384 = vsub.f32 1.0, %v1383
    %v1385 = vmul.f32 %v1382, %v1384
    %v1386 = vadd.f32 %v1382, %v1385
    %vm1387 = vweird.f32 %v1381
    %vm1388 = vweird.f32 %v1382
    %vm1389 = vmor %vm1387, %vm1388
    %v1390 = vsel %vm1389, %v1382, %v1386
    %v1391 = vand.u32 2147483647, %v1381
    %vm1392 = vcmp.eq.f32.partialorder %v1391, 8.507059e+37
    %v1393 = vand.u32 %v1381, 2147483648
    %v1394 = vor.u32 1.1754944e-38, %v1393
    %v1395 = vsel %vm1392, %v1394, %v1390
    %v1396 = vmul.f32 1.0, %v1395
    %v1397 = vtanh.pop %v1357
    %v1398 = vxor.u32 %v1358, 2147483648
    %v1399 = vmul.f32 %v1398, 1.442695
    %v1400 = vpow.pop %v1399
    %v1401 = vadd.f32 %v1400, 1.0
    %v1402 = vrcp.pop %v1401
    %v1403 = vmul.f32 %v1401, %v1402
    %v1404 = vsub.f32 1.0, %v1403
    %v1405 = vmul.f32 %v1402, %v1404
    %v1406 = vadd.f32 %v1402, %v1405
    %vm1407 = vweird.f32 %v1401
    %vm1408 = vweird.f32 %v1402
    %vm1409 = vmor %vm1407, %vm1408
    %v1410 = vsel %vm1409, %v1402, %v1406
    %v1411 = vand.u32 2147483647, %v1401
    %vm1412 = vcmp.eq.f32.partialorder %v1411, 8.507059e+37
    %v1413 = vand.u32 %v1401, 2147483648
    %v1414 = vor.u32 1.1754944e-38, %v1413
    %v1415 = vsel %vm1412, %v1414, %v1410
    %v1416 = vmul.f32 1.0, %v1415
    %v1418 = vrot.slane %v1257, 7
    %v1420 = vmul.f32 %v1396, %v1418
    %v1421 = vmul.f32 %v1377, %v1397
    %v1422 = vadd.f32 %v1420, %v1421
    %v1423 = vtanh.pop %v1422
    %v1424 = vmul.f32 %v1416, %v1423
    %v1426 = vrot.slane %v1424, 6
    %1428 = vmatpush.msra.mxu0 %v285
    %1429 = vmatpush.msra.mxu0 %v281
    %1430 = vmatpush.msra.mxu0 %v277
    %1431 = vmatpush.msra.mxu0 %v273
    %1432 = vmatpush.msra.mxu0 %v269
    %1433 = vmatpush.msra.mxu0 %v265
    %1434 = vmatpush.msra.mxu0 %v261
    %1435 = vmatpush.msra.mxu0 %v257
    %1436 = vmatpush.msra.mxu0 %v253
    %1437 = vmatpush.msra.mxu0 %v249
    %1438 = vmatpush.msra.mxu0 %v245
    %1439 = vmatpush.msra.mxu0 %v241
    %1440 = vmatpush.msra.mxu0 %v237
    %1441 = vmatpush.msra.mxu0 %v233
    %1442 = vmatpush.msra.mxu0 %v229
    %1443 = vmatpush.msra.mxu0 %v225
    %1444 = vmatmul.f32.gmra.mxu0 %v1426
    %v1445 = vpop.f32.mrf.mxu0
    %v1446 = vadd.f32 0.0, %v1445
    %1447 = vdwg.mxu0
    %1448 = vmatpush.msra.mxu0 %v286
    %1449 = vmatpush.msra.mxu0 %v282
    %1450 = vmatpush.msra.mxu0 %v278
    %1451 = vmatpush.msra.mxu0 %v274
    %1452 = vmatpush.msra.mxu0 %v270
    %1453 = vmatpush.msra.mxu0 %v266
    %1454 = vmatpush.msra.mxu0 %v262
    %1455 = vmatpush.msra.mxu0 %v258
    %1456 = vmatpush.msra.mxu0 %v254
    %1457 = vmatpush.msra.mxu0 %v250
    %1458 = vmatpush.msra.mxu0 %v246
    %1459 = vmatpush.msra.mxu0 %v242
    %1460 = vmatpush.msra.mxu0 %v238
    %1461 = vmatpush.msra.mxu0 %v234
    %1462 = vmatpush.msra.mxu0 %v230
    %1463 = vmatpush.msra.mxu0 %v226
    %1464 = vmatmul.f32.gmra.mxu0 %v1426
    %v1465 = vpop.f32.mrf.mxu0
    %v1466 = vadd.f32 0.0, %v1465
    %1467 = vdwg.mxu0
    %1468 = vmatpush.msra.mxu0 %v287
    %1469 = vmatpush.msra.mxu0 %v283
    %1470 = vmatpush.msra.mxu0 %v279
    %1471 = vmatpush.msra.mxu0 %v275
    %1472 = vmatpush.msra.mxu0 %v271
    %1473 = vmatpush.msra.mxu0 %v267
    %1474 = vmatpush.msra.mxu0 %v263
    %1475 = vmatpush.msra.mxu0 %v259
    %1476 = vmatpush.msra.mxu0 %v255
    %1477 = vmatpush.msra.mxu0 %v251
    %1478 = vmatpush.msra.mxu0 %v247
    %1479 = vmatpush.msra.mxu0 %v243
    %1480 = vmatpush.msra.mxu0 %v239
    %1481 = vmatpush.msra.mxu0 %v235
    %1482 = vmatpush.msra.mxu0 %v231
    %1483 = vmatpush.msra.mxu0 %v227
    %1484 = vmatmul.f32.gmra.mxu0 %v1426
    %v1485 = vpop.f32.mrf.mxu0
    %v1486 = vadd.f32 0.0, %v1485
    %1487 = vdwg.mxu0
    %1488 = vmatpush.msra.mxu0 %v288
    %1489 = vmatpush.msra.mxu0 %v284
    %1490 = vmatpush.msra.mxu0 %v280
    %1491 = vmatpush.msra.mxu0 %v276
    %1492 = vmatpush.msra.mxu0 %v272
    %1493 = vmatpush.msra.mxu0 %v268
    %1494 = vmatpush.msra.mxu0 %v264
    %1495 = vmatpush.msra.mxu0 %v260
    %1496 = vmatpush.msra.mxu0 %v256
    %1497 = vmatpush.msra.mxu0 %v252
    %1498 = vmatpush.msra.mxu0 %v248
    %1499 = vmatpush.msra.mxu0 %v244
    %1500 = vmatpush.msra.mxu0 %v240
    %1501 = vmatpush.msra.mxu0 %v236
    %1502 = vmatpush.msra.mxu0 %v232
    %1503 = vmatpush.msra.mxu0 %v228
    %1504 = vmatmul.f32.gmra.mxu0 %v1426
    %v1505 = vpop.f32.mrf.mxu0
    %v1506 = vadd.f32 0.0, %v1505
    %1507 = vdwg.mxu0
    %v1512 = vrot.slane %v1446, 1
    %v1513 = vrot.slane %v1466, 1
    %v1514 = vrot.slane %v1486, 1
    %v1515 = vrot.slane %v1506, 1
    %v1520 = vadd.f32 %v163, %v1512
    %v1521 = vadd.f32 %v183, %v1513
    %v1522 = vadd.f32 %v203, %v1514
    %v1523 = vadd.f32 %v223, %v1515
    %v1524 = vxor.u32 %v1520, 2147483648
    %v1525 = vmul.f32 %v1524, 1.442695
    %v1526 = vpow.pop %v1525
    %v1527 = vadd.f32 %v1526, 1.0
    %v1528 = vrcp.pop %v1527
    %v1529 = vmul.f32 %v1527, %v1528
    %v1530 = vsub.f32 1.0, %v1529
    %v1531 = vmul.f32 %v1528, %v1530
    %v1532 = vadd.f32 %v1528, %v1531
    %vm1533 = vweird.f32 %v1527
    %vm1534 = vweird.f32 %v1528
    %vm1535 = vmor %vm1533, %vm1534
    %v1536 = vsel %vm1535, %v1528, %v1532
    %v1537 = vand.u32 2147483647, %v1527
    %vm1538 = vcmp.eq.f32.partialorder %v1537, 8.507059e+37
    %v1539 = vand.u32 %v1527, 2147483648
    %v1540 = vor.u32 1.1754944e-38, %v1539
    %v1541 = vsel %vm1538, %v1540, %v1536
    %v1542 = vmul.f32 1.0, %v1541
    %v1543 = vxor.u32 %v1521, 2147483648
    %v1544 = vmul.f32 %v1543, 1.442695
    %v1545 = vpow.pop %v1544
    %v1546 = vadd.f32 %v1545, 1.0
    %v1547 = vrcp.pop %v1546
    %v1548 = vmul.f32 %v1546, %v1547
    %v1549 = vsub.f32 1.0, %v1548
    %v1550 = vmul.f32 %v1547, %v1549
    %v1551 = vadd.f32 %v1547, %v1550
    %vm1552 = vweird.f32 %v1546
    %vm1553 = vweird.f32 %v1547
    %vm1554 = vmor %vm1552, %vm1553
    %v1555 = vsel %vm1554, %v1547, %v1551
    %v1556 = vand.u32 2147483647, %v1546
    %vm1557 = vcmp.eq.f32.partialorder %v1556, 8.507059e+37
    %v1558 = vand.u32 %v1546, 2147483648
    %v1559 = vor.u32 1.1754944e-38, %v1558
    %v1560 = vsel %vm1557, %v1559, %v1555
    %v1561 = vmul.f32 1.0, %v1560
    %v1562 = vtanh.pop %v1522
    %v1563 = vxor.u32 %v1523, 2147483648
    %v1564 = vmul.f32 %v1563, 1.442695
    %v1565 = vpow.pop %v1564
    %v1566 = vadd.f32 %v1565, 1.0
    %v1567 = vrcp.pop %v1566
    %v1568 = vmul.f32 %v1566, %v1567
    %v1569 = vsub.f32 1.0, %v1568
    %v1570 = vmul.f32 %v1567, %v1569
    %v1571 = vadd.f32 %v1567, %v1570
    %vm1572 = vweird.f32 %v1566
    %vm1573 = vweird.f32 %v1567
    %vm1574 = vmor %vm1572, %vm1573
    %v1575 = vsel %vm1574, %v1567, %v1571
    %v1576 = vand.u32 2147483647, %v1566
    %vm1577 = vcmp.eq.f32.partialorder %v1576, 8.507059e+37
    %v1578 = vand.u32 %v1566, 2147483648
    %v1579 = vor.u32 1.1754944e-38, %v1578
    %v1580 = vsel %vm1577, %v1579, %v1575
    %v1581 = vmul.f32 1.0, %v1580
    %v1583 = vrot.slane %v1422, 7
    %v1585 = vmul.f32 %v1561, %v1583
    %v1586 = vmul.f32 %v1542, %v1562
    %v1587 = vadd.f32 %v1585, %v1586
    %v1588 = vtanh.pop %v1587
    %v1589 = vmul.f32 %v1581, %v1588
    %1590 = vst [vmem:[#allocation14 - $0x7] sm:$0x80] %v1589
    %1591 = vst [vmem:[#allocation16 - $0x7] sm:$0x80] %v1587
    %vm1592 = vcmask 1040384
    %v1593 = vsel %vm1592, %v437, %v599
    %vm1594 = vcmask 1041408
    %v1595 = vsel %vm1594, %v1593, %v764
    %vm1596 = vcmask 1042432
    %v1597 = vsel %vm1596, %v1595, %v929
    %vm1598 = vcmask 1043456
    %v1599 = vsel %vm1598, %v1597, %v1094
    %vm1600 = vcmask 1044480
    %v1601 = vsel %vm1600, %v1599, %v1259
    %vm1602 = vcmask 1045504
    %v1603 = vsel %vm1602, %v1601, %v1424
    %vm1604 = vcmask 1046528
    %v1605 = vsel %vm1604, %v1603, %v1589
    %v1606 = vld [vmem:[#allocation11] sm:$0xff]
    %v1607 = vld [vmem:[#allocation11 + $0x8] sm:$0xff]
    %v1608 = vld [vmem:[#allocation11 + $0x10] sm:$0xff]
    %v1609 = vld [vmem:[#allocation11 + $0x18] sm:$0xff]
    %v1610 = vld [vmem:[#allocation11 + $0x20] sm:$0xff]
    %v1611 = vld [vmem:[#allocation11 + $0x28] sm:$0xff]
    %v1612 = vld [vmem:[#allocation11 + $0x30] sm:$0xff]
    %v1613 = vld [vmem:[#allocation11 + $0x38] sm:$0xff]
    %v1614 = vld [vmem:[#allocation11 + $0x40] sm:$0xff]
    %v1615 = vld [vmem:[#allocation11 + $0x48] sm:$0xff]
    %v1616 = vld [vmem:[#allocation11 + $0x50] sm:$0xff]
    %v1617 = vld [vmem:[#allocation11 + $0x58] sm:$0xff]
    %v1618 = vld [vmem:[#allocation11 + $0x60] sm:$0xff]
    %v1619 = vld [vmem:[#allocation11 + $0x68] sm:$0xff]
    %v1620 = vld [vmem:[#allocation11 + $0x70] sm:$0xff]
    %v1621 = vld [vmem:[#allocation11 + $0x78] sm:$0xff]
    %v1622 = vld [vmem:[%s7] sm:$0x1]
    %v1624 = vperm.slane %v1622, 0
    %1626 = vmatpush.msra.mxu0 %v1621
    %1627 = vmatpush.msra.mxu0 %v1620
    %1628 = vmatpush.msra.mxu0 %v1619
    %1629 = vmatpush.msra.mxu0 %v1618
    %1630 = vmatpush.msra.mxu0 %v1617
    %1631 = vmatpush.msra.mxu0 %v1616
    %1632 = vmatpush.msra.mxu0 %v1615
    %1633 = vmatpush.msra.mxu0 %v1614
    %1634 = vmatpush.msra.mxu0 %v1613
    %1635 = vmatpush.msra.mxu0 %v1612
    %1636 = vmatpush.msra.mxu0 %v1611
    %1637 = vmatpush.msra.mxu0 %v1610
    %1638 = vmatpush.msra.mxu0 %v1609
    %1639 = vmatpush.msra.mxu0 %v1608
    %1640 = vmatpush.msra.mxu0 %v1607
    %1641 = vmatpush.msra.mxu0 %v1606
    %1642 = vmatmul.f32.gmra.mxu0 %v1605
    %v1643 = vpop.f32.mrf.mxu0
    %v1644 = vadd.f32 %v1624, %v1643
    %1645 = vdwg.mxu0
    %v1646 = vmax.f32 %v1644, 0.0
    %v1647 = vlaneseq
    %v1648 = vand.u32 %v1647, 127
    %vm1649 = vcmp.lt.s32.totalorder %v1648, 16
    %v1650 = vsel %vm1649, %v1646, -1e+30
    %1651 = vmax.xlane.f32.xlu0 %v1650
    %v1652 = vpop.xlane.xlu0 %1651
    %v1653 = vsub.f32 %v1650, %v1652
    %v1654 = vmul.f32 %v1653, 1.442695
    %v1655 = vpow.pop %v1654
    %1656 = vadd.xlane.f32.xlu0 %v1655
    %v1657 = vpop.xlane.xlu0 %1656
    %v1658 = vlog2.pop %v1657
    %v1659 = vmul.f32 %v1658, 0.6931472
    %v1660 = vsub.f32 %v1653, %v1659
    %1661 = vst [vmem:[#allocation13] sm:$0xff] %v1660
    // Predicated region
    $region58: #{tpu_custom_call.1} parent=1 // pred_check
      _
    $region59: #{tpu_custom_call.1} parent=1 // pred_check_branch
      %1663 = sbr.rel (0) target = $region61
    $region60: #{tpu_custom_call.1} parent=1 // pred_region
      %1665 = vsyncadd [#allocation4], 0
      %s1667 = sshll.u32 [#allocation13], 4
      %s1668 = int_to_ptr.vmem [resolvable:$true] %s1667
      %s1669 = sshll.u32 %s8, 4
      %s1670 = int_to_ptr.hbm [resolvable:$true] %s1669
      %1672 = dma.vmem_to_hbm [thread:$0]  %s1668, 128, %s1670, [#allocation4]
    $region61: #{tpu_custom_call.1} parent=1 // pred_fallthru
      _
    // Predicated region
    $region62: #{tpu_custom_call.1} parent=1 // pred_check
      _
    $region63: #{tpu_custom_call.1} parent=1 // pred_check_branch
      %1674 = sbr.rel (0) target = $region65
    $region64: #{tpu_custom_call.1} parent=1 // pred_region
      %1676 = vsyncadd [#allocation15], 0
      %s1678 = sshll.u32 [#allocation14], 4
      %s1679 = int_to_ptr.vmem [resolvable:$true] %s1678
      %s1680 = sshll.u32 %s9, 4
      %s1681 = int_to_ptr.hbm [resolvable:$true] %s1680
      %1683 = dma.vmem_to_hbm [thread:$0]  %s1679, 16, %s1681, [#allocation15]
    $region65: #{tpu_custom_call.1} parent=1 // pred_fallthru
      _
    // Predicated region
    $region66: #{tpu_custom_call.1} parent=1 // pred_check
      _
    $region67: #{tpu_custom_call.1} parent=1 // pred_check_branch
      %1685 = sbr.rel (0) target = $region69
    $region68: #{tpu_custom_call.1} parent=1 // pred_region
      %1687 = vsyncadd [#allocation15], 0
      %s1689 = sshll.u32 [#allocation16], 4
      %s1690 = int_to_ptr.vmem [resolvable:$true] %s1689
      %s1691 = sshll.u32 %s10, 4
      %s1692 = int_to_ptr.hbm [resolvable:$true] %s1691
      %1694 = dma.vmem_to_hbm [thread:$0]  %s1690, 16, %s1692, [#allocation15]
    $region69: #{tpu_custom_call.1} parent=1 // pred_fallthru
      _
    // Predicated region
    $region70: #{tpu_custom_call.1} parent=1 // pred_check
      _
    $region71: #{tpu_custom_call.1} parent=1 // pred_check_branch
      %1696 = sbr.rel (0) target = $region73
    $region72: #{tpu_custom_call.1} parent=1 // pred_region
      %1698 = dma.done [#allocation4], 128
    $region73: #{tpu_custom_call.1} parent=1 // pred_fallthru
      _
    // Predicated region
    $region74: #{tpu_custom_call.1} parent=1 // pred_check
      _
    $region75: #{tpu_custom_call.1} parent=1 // pred_check_branch
      %1700 = sbr.rel (0) target = $region77
    $region76: #{tpu_custom_call.1} parent=1 // pred_region
      %1702 = dma.done [#allocation15], 16
    $region77: #{tpu_custom_call.1} parent=1 // pred_fallthru
      _
    // Predicated region
    $region78: #{tpu_custom_call.1} parent=1 // pred_check
      _
    $region79: #{tpu_custom_call.1} parent=1 // pred_check_branch
      %1704 = sbr.rel (0) target = $region81
    $region80: #{tpu_custom_call.1} parent=1 // pred_region
      %1706 = dma.done [#allocation15], 16
    $region81: #{tpu_custom_call.1} parent=1 // pred_fallthru
      _
    %1707 = vsyncpa [#allocation3], 1
    %1708 = vsyncpa [#allocation6], 1
    %1709 = vsyncpa [#allocation9], 1
    %1710 = vsyncpa [#allocation12], 1
    %1711 = vsyncpa [#allocation4], 1
    %1712 = vsyncpa [#allocation15], 1

</llo_original>
